<compile_context>
chip_gen: v6e
topology: v6e:2x2x1
jax: 0.10.0
libtpu: 0.0.40
codegen_flags: <defaults>
</compile_context>

<pallas_src>
import functools

import jax
import jax.numpy as jnp
from jax import lax
from jax.experimental import pallas as pl
from jax.experimental.pallas import tpu as pltpu


# ---------------------------------------------------------------------------
# Fused Pallas kernel
# ---------------------------------------------------------------------------

def _bottleneck_kernel(xm_ref, xt_ref, xb_ref,
                       w1_ref, w2_ref, w3_ref,
                       s1_ref, b1_ref, s2_ref, b2_ref, s3_ref, b3_ref,
                       o_ref):
    """One (batch, row-tile) step of the fused bottleneck block."""
    t = pl.program_id(1)
    nt = pl.num_programs(1)
    _, TH, W, Cin = xm_ref.shape                # x tile block (1, TH, W, Cin)
    P = w1_ref.shape[1]                         # planes
    C4 = w3_ref.shape[1]                        # planes * 4 (== Cin)

    x_mid = xm_ref[0]                           # (TH, W, Cin) bf16
    # rows [t*TH - 1, t*TH + TH] (halo rows are clamped reads; masked below).
    x_all = jnp.concatenate([xt_ref[0], x_mid, xb_ref[0]], axis=0)  # (TH+2,W,Cin)

    # ---- conv1 (1x1) + bn1 + relu on tile + halo rows ---------------------
    h1 = jnp.dot(x_all.reshape((TH + 2) * W, Cin), w1_ref[...],
                 preferred_element_type=jnp.float32)
    h1 = jnp.maximum(h1 * s1_ref[...] + b1_ref[...], 0.0)
    h1 = h1.reshape(TH + 2, W, P)

    # Halo rows that fall outside the image must be conv2's ZERO padding
    # (a zero input row would otherwise yield relu(bn-shift) != 0).
    row = lax.broadcasted_iota(jnp.int32, (TH + 2, W, P), 0)
    keep = jnp.logical_and(jnp.logical_or(row > 0, t > 0),
                           jnp.logical_or(row < TH + 1, t < nt - 1))
    h1 = jnp.where(keep, h1, 0.0).astype(jnp.bfloat16)

    # Zero-pad the W axis in VMEM for the 3x3 conv.
    zcol = jnp.zeros((TH + 2, 1, P), jnp.bfloat16)
    h1p = jnp.concatenate([zcol, h1, zcol], axis=1)      # (TH+2, W+2, P)

    # ---- conv2 (3x3, pad=1) + bn2 + relu: 9 shifted-tap matmuls -----------
    acc = jnp.zeros((TH * W, P), jnp.float32)
    for k in range(9):
        dy, dx = divmod(k, 3)
        tap = h1p[dy:dy + TH, dx:dx + W, :].reshape(TH * W, P)
        acc = acc + jnp.dot(tap, w2_ref[k], preferred_element_type=jnp.float32)
    h2 = jnp.maximum(acc * s2_ref[...] + b2_ref[...], 0.0)

    # ---- conv3 (1x1) + bn3 + residual add + relu --------------------------
    y = jnp.dot(h2.astype(jnp.bfloat16), w3_ref[...],
                preferred_element_type=jnp.float32)
    res = x_mid.reshape(TH * W, Cin).astype(jnp.float32)
    y = jnp.maximum(y * s3_ref[...] + b3_ref[...] + res, 0.0)
    o_ref[...] = y.reshape(1, TH, W, C4)


# ---------------------------------------------------------------------------
# Wrapper
# ---------------------------------------------------------------------------

def _fold_bn(bn, eps=1e-5):
    scale = bn["gamma"] / jnp.sqrt(bn["var"] + eps)
    shift = bn["beta"] - bn["mean"] * scale
    return (scale.reshape(1, -1).astype(jnp.float32),
            shift.reshape(1, -1).astype(jnp.float32))


def _pick_row_tile(H, W, cin, cout, max_rows=8, budget_bytes=4 * 1024 * 1024):
    """Largest divisor of H <= max_rows whose (in + out) tile fits the budget.

    Sized so that 2x double-buffered (bf16 in + f32 out) tiles stay far below
    the 64 MiB VMEM of v7x (and the 32 MiB default scoped limit elsewhere).
    """
    best = 1
    for th in range(1, min(H, max_rows) + 1):
        if H % th:
            continue
        tile_bytes = th * W * (cin * 2 + cout * 4)
        if tile_bytes <= budget_bytes:
            best = th
    return best


@functools.partial(jax.jit, static_argnames=("stride",))
def bottleneck_forward(x_nchw, params, stride=1):
    """Bottleneck forward (downsample=None => Cin == planes*4, stride == 1)."""
    if stride != 1:
        raise NotImplementedError("stride > 1 / downsample path not implemented")
    N, Cin, H, W = x_nchw.shape
    P = params["w1"].shape[0]
    C4 = 4 * P
    assert Cin == C4, "downsample=None requires inplanes == planes * 4"

    # NHWC, bf16 activations for the MXU (accumulation stays f32 in-kernel).
    x = jnp.transpose(x_nchw, (0, 2, 3, 1)).astype(jnp.bfloat16)

    w1 = params["w1"][:, :, 0, 0].T.astype(jnp.bfloat16)               # (Cin, P)
    w2 = jnp.transpose(params["w2"], (2, 3, 1, 0)).reshape(9, P, P)    # (9,P,P)
    w2 = w2.astype(jnp.bfloat16)
    w3 = params["w3"][:, :, 0, 0].T.astype(jnp.bfloat16)               # (P, C4)
    s1, b1 = _fold_bn(params["bn1"])
    s2, b2 = _fold_bn(params["bn2"])
    s3, b3 = _fold_bn(params["bn3"])

    TH = _pick_row_tile(H, W, Cin, C4)
    NT = H // TH

    def mid_map(n, t):                       # tile rows [t*TH, t*TH + TH)
        return (n, t, 0, 0)

    def top_map(n, t):                       # halo row t*TH - 1 (clamped, masked)
        return (n, jnp.maximum(t * TH - 1, 0), 0, 0)

    def bot_map(n, t):                       # halo row t*TH + TH (clamped, masked)
        return (n, jnp.minimum(t * TH + TH, H - 1), 0, 0)

    def whole(shape):                        # resident weights / BN params
        return pl.BlockSpec(shape, lambda n, t: (0,) * len(shape))

    flops = 2 * N * H * W * (Cin * P + 9 * P * P + P * C4)
    bytes_accessed = (N * H * W * Cin * 2            # x read (bf16)
                      + N * H * W * C4 * 4           # out write (f32)
                      + 2 * (w1.size + w2.size + w3.size))

    out = pl.pallas_call(
        _bottleneck_kernel,
        out_shape=jax.ShapeDtypeStruct((N, H, W, C4), jnp.float32),
        grid=(N, NT),
        in_specs=[
            pl.BlockSpec((1, TH, W, Cin), mid_map),
            pl.BlockSpec((1, 1, W, Cin), top_map),
            pl.BlockSpec((1, 1, W, Cin), bot_map),
            whole((Cin, P)),
            whole((9, P, P)),
            whole((P, C4)),
            whole((1, P)), whole((1, P)),
            whole((1, P)), whole((1, P)),
            whole((1, C4)), whole((1, C4)),
        ],
        out_specs=pl.BlockSpec((1, TH, W, C4), mid_map),
        compiler_params=pltpu.CompilerParams(
            dimension_semantics=("parallel", "parallel"),
            vmem_limit_bytes=64 * 1024 * 1024),
        cost_estimate=pl.CostEstimate(flops=flops, transcendentals=0,
                                      bytes_accessed=bytes_accessed),
    )(x, x, x, w1, w2, w3, s1, b1, s2, b2, s3, b3)

    return jnp.transpose(out, (0, 3, 1, 2))            # back to NCHW, f32


# ---------------------------------------------------------------------------
# Pure-JAX reference (PyTorch semantics, inference-mode BN)
# ---------------------------------------------------------------------------

def reference_forward(x, params, stride=1, eps=1e-5):
    def conv(x, w, s=1, p=0):
        return lax.conv_general_dilated(
            x, w, (s, s), ((p, p), (p, p)),
            dimension_numbers=("NCHW", "OIHW", "NCHW"))

    def bn(x, b):
        sc = b["gamma"] / jnp.sqrt(b["var"] + eps)
        sh = b["beta"] - b["mean"] * sc
        return x * sc[None, :, None, None] + sh[None, :, None, None]

    out = jnp.maximum(bn(conv(x, params["w1"]), params["bn1"]), 0.0)
    out = jnp.maximum(bn(conv(out, params["w2"], stride, 1), params["bn2"]), 0.0)
    out = bn(conv(out, params["w3"]), params["bn3"])
    return jnp.maximum(out + x, 0.0)


# ---------------------------------------------------------------------------
# Deterministic parameter init + smoke test
# ---------------------------------------------------------------------------

def init_params(key, inplanes, planes):
    ks = jax.random.split(key, 16)

    def conv_w(k, cout, cin, kh, kw):
        fan_in = cin * kh * kw
        return jax.random.normal(k, (cout, cin, kh, kw), jnp.float32) * \
            (2.0 / fan_in) ** 0.5

    def bn_p(k, c):
        k1, k2, k3, k4 = jax.random.split(k, 4)
        return dict(
            gamma=0.5 + jax.random.uniform(k1, (c,), jnp.float32),
            beta=0.1 * jax.random.normal(k2, (c,), jnp.float32),
            mean=0.1 * jax.random.normal(k3, (c,), jnp.float32),
            var=0.5 + jax.random.uniform(k4, (c,), jnp.float32),
        )

    return dict(
        w1=conv_w(ks[0], planes, inplanes, 1, 1),
        bn1=bn_p(ks[1], planes),
        w2=conv_w(ks[2], planes, planes, 3, 3),
        bn2=bn_p(ks[3], planes),
        w3=conv_w(ks[4], planes * 4, planes, 1, 1),
        bn3=bn_p(ks[5], planes * 4),
    )


if __name__ == "__main__":
    key = jax.random.PRNGKey(0)
    k_param, k_x = jax.random.split(key)

    planes = 4
    inplanes = planes * 4          # downsample=None requires inplanes == planes*4
    N, H, W = 2, 16, 16            # H=16 with 8-row tiles => cross-tile halos exercised
    stride = 1

    params = init_params(k_param, inplanes, planes)
    x = jax.random.normal(k_x, (N, inplanes, H, W), jnp.float32)

    out = jax.block_until_ready(bottleneck_forward(x, params, stride=stride))
    ref = jax.block_until_ready(reference_forward(x, params, stride=stride))

    assert out.shape == (N, planes * 4, H, W), out.shape
    max_err = float(jnp.max(jnp.abs(out - ref)))
    assert jnp.allclose(out, ref, rtol=5e-2, atol=5e-2), max_err

    print("KERNEL_OK")
</pallas_src>

<mosaic_0001>
module attributes {stable_mosaic.version = 11 : i64} {
  func.func @_bottleneck_kernel(%arg0: i32, %arg1: i32, %arg2: memref<1x8x16x16xbf16, #tpu.memory_space<vmem>>, %arg3: memref<1x1x16x16xbf16, #tpu.memory_space<vmem>>, %arg4: memref<1x1x16x16xbf16, #tpu.memory_space<vmem>>, %arg5: memref<16x4xbf16, #tpu.memory_space<vmem>>, %arg6: memref<9x4x4xbf16, #tpu.memory_space<vmem>>, %arg7: memref<4x16xbf16, #tpu.memory_space<vmem>>, %arg8: memref<1x4xf32, #tpu.memory_space<vmem>>, %arg9: memref<1x4xf32, #tpu.memory_space<vmem>>, %arg10: memref<1x4xf32, #tpu.memory_space<vmem>>, %arg11: memref<1x4xf32, #tpu.memory_space<vmem>>, %arg12: memref<1x16xf32, #tpu.memory_space<vmem>>, %arg13: memref<1x16xf32, #tpu.memory_space<vmem>>, %arg14: memref<1x8x16x16xf32, #tpu.memory_space<vmem>>) attributes {dimension_semantics = [#tpu.dimension_semantics<parallel>, #tpu.dimension_semantics<parallel>], iteration_bounds = array<i64: 2, 2>, scalar_prefetch = 0 : i64, scratch_operands = 0 : i64, tpu.core_type = #tpu.core_type<tc>, window_params = [{transform_indices = @transform_0, window_bounds = array<i64: 1, 8, 16, 16>}, {transform_indices = @transform_1, window_bounds = array<i64: 1, 1, 16, 16>}, {transform_indices = @transform_2, window_bounds = array<i64: 1, 1, 16, 16>}, {pipeline_mode = #tpu.pipeline_mode<synchronous>, transform_indices = @transform_3, window_bounds = array<i64: 16, 4>}, {pipeline_mode = #tpu.pipeline_mode<synchronous>, transform_indices = @transform_4, window_bounds = array<i64: 9, 4, 4>}, {pipeline_mode = #tpu.pipeline_mode<synchronous>, transform_indices = @transform_5, window_bounds = array<i64: 4, 16>}, {pipeline_mode = #tpu.pipeline_mode<synchronous>, transform_indices = @transform_6, window_bounds = array<i64: 1, 4>}, {pipeline_mode = #tpu.pipeline_mode<synchronous>, transform_indices = @transform_7, window_bounds = array<i64: 1, 4>}, {pipeline_mode = #tpu.pipeline_mode<synchronous>, transform_indices = @transform_8, window_bounds = array<i64: 1, 4>}, {pipeline_mode = #tpu.pipeline_mode<synchronous>, transform_indices = @transform_9, window_bounds = array<i64: 1, 4>}, {pipeline_mode = #tpu.pipeline_mode<synchronous>, transform_indices = @transform_10, window_bounds = array<i64: 1, 16>}, {pipeline_mode = #tpu.pipeline_mode<synchronous>, transform_indices = @transform_11, window_bounds = array<i64: 1, 16>}, {transform_indices = @transform_12, window_bounds = array<i64: 1, 8, 16, 16>}]} {
    %c0 = arith.constant 0 : index
    %c0_0 = arith.constant 0 : index
    %c0_1 = arith.constant 0 : index
    %c0_2 = arith.constant 0 : index
    %0 = vector.load %arg2[%c0, %c0_0, %c0_1, %c0_2] : memref<1x8x16x16xbf16, #tpu.memory_space<vmem>>, vector<1x8x16x16xbf16>
    %1 = vector.shape_cast %0 : vector<1x8x16x16xbf16> to vector<8x16x16xbf16>
    %c0_3 = arith.constant 0 : index
    %c0_4 = arith.constant 0 : index
    %c0_5 = arith.constant 0 : index
    %c0_6 = arith.constant 0 : index
    %2 = vector.load %arg3[%c0_3, %c0_4, %c0_5, %c0_6] : memref<1x1x16x16xbf16, #tpu.memory_space<vmem>>, vector<1x1x16x16xbf16>
    %3 = vector.shape_cast %2 : vector<1x1x16x16xbf16> to vector<1x16x16xbf16>
    %c0_7 = arith.constant 0 : index
    %c0_8 = arith.constant 0 : index
    %c0_9 = arith.constant 0 : index
    %c0_10 = arith.constant 0 : index
    %4 = vector.load %arg4[%c0_7, %c0_8, %c0_9, %c0_10] : memref<1x1x16x16xbf16, #tpu.memory_space<vmem>>, vector<1x1x16x16xbf16>
    %5 = vector.shape_cast %4 : vector<1x1x16x16xbf16> to vector<1x16x16xbf16>
    %6 = tpu.concatenate %3, %1, %5 in 0 : vector<1x16x16xbf16>, vector<8x16x16xbf16>, vector<1x16x16xbf16> -> vector<10x16x16xbf16>
    %7 = vector.shape_cast %6 : vector<10x16x16xbf16> to vector<160x16xbf16>
    %c0_11 = arith.constant 0 : index
    %c0_12 = arith.constant 0 : index
    %8 = vector.load %arg5[%c0_11, %c0_12] : memref<16x4xbf16, #tpu.memory_space<vmem>>, vector<16x4xbf16>
    %cst = arith.constant dense<0.000000e+00> : vector<160x4xf32>
    %9 = tpu.matmul %7, %8, %cst {dimension_numbers = #tpu.dot_dimension_numbers<[1], [0], [0], [1], [0, 0, 1, 1], [], []>} : vector<160x16xbf16>, vector<16x4xbf16>, vector<160x4xf32> -> vector<160x4xf32>
    %c0_13 = arith.constant 0 : index
    %c0_14 = arith.constant 0 : index
    %10 = vector.load %arg8[%c0_13, %c0_14] : memref<1x4xf32, #tpu.memory_space<vmem>>, vector<1x4xf32>
    %11 = vector.broadcast %10 : vector<1x4xf32> to vector<160x4xf32>
    %12 = arith.mulf %9, %11 : vector<160x4xf32>
    %c0_15 = arith.constant 0 : index
    %c0_16 = arith.constant 0 : index
    %13 = vector.load %arg9[%c0_15, %c0_16] : memref<1x4xf32, #tpu.memory_space<vmem>>, vector<1x4xf32>
    %14 = vector.broadcast %13 : vector<1x4xf32> to vector<160x4xf32>
    %15 = arith.addf %12, %14 : vector<160x4xf32>
    %cst_17 = arith.constant 0.000000e+00 : f32
    %16 = vector.broadcast %cst_17 : f32 to vector<160x4xf32>
    %17 = arith.maximumf %15, %16 : vector<160x4xf32>
    %18 = vector.shape_cast %17 : vector<160x4xf32> to vector<10x16x4xf32>
    %19 = tpu.iota {dimensions = array<i32: 0>} : vector<10x16x4xi32>
    %c0_i32 = arith.constant 0 : i32
    %20 = vector.broadcast %c0_i32 : i32 to vector<10x16x4xi32>
    %21 = arith.cmpi sgt, %19, %20 : vector<10x16x4xi32>
    %c0_i32_18 = arith.constant 0 : i32
    %22 = arith.cmpi sgt, %arg1, %c0_i32_18 : i32
    %23 = vector.broadcast %22 : i1 to vector<10x16x4xi1>
    %24 = arith.ori %21, %23 : vector<10x16x4xi1>
    %c9_i32 = arith.constant 9 : i32
    %25 = vector.broadcast %c9_i32 : i32 to vector<10x16x4xi32>
    %26 = arith.cmpi slt, %19, %25 : vector<10x16x4xi32>
    %c1_i32 = arith.constant 1 : i32
    %27 = arith.cmpi slt, %arg1, %c1_i32 : i32
    %28 = vector.broadcast %27 : i1 to vector<10x16x4xi1>
    %29 = arith.ori %26, %28 : vector<10x16x4xi1>
    %30 = arith.andi %24, %29 : vector<10x16x4xi1>
    %cst_19 = arith.constant 0.000000e+00 : f32
    %31 = vector.broadcast %cst_19 : f32 to vector<10x16x4xf32>
    %32 = arith.select %30, %18, %31 : vector<10x16x4xi1>, vector<10x16x4xf32>
    %33 = arith.truncf %32 : vector<10x16x4xf32> to vector<10x16x4xbf16>
    %cst_20 = arith.constant 0.000000e+00 : bf16
    %34 = vector.broadcast %cst_20 : bf16 to vector<10x1x4xbf16>
    %35 = tpu.concatenate %34, %33, %34 in 1 : vector<10x1x4xbf16>, vector<10x16x4xbf16>, vector<10x1x4xbf16> -> vector<10x18x4xbf16>
    %cst_21 = arith.constant 0.000000e+00 : f32
    %36 = vector.broadcast %cst_21 : f32 to vector<128x4xf32>
    %37 = vector.extract_strided_slice %35 {offsets = [0, 0, 0], sizes = [8, 16, 4], strides = [1, 1, 1]} : vector<10x18x4xbf16> to vector<8x16x4xbf16>
    %38 = vector.shape_cast %37 : vector<8x16x4xbf16> to vector<128x4xbf16>
    %c0_22 = arith.constant 0 : index
    %c0_23 = arith.constant 0 : index
    %c0_24 = arith.constant 0 : index
    %39 = vector.load %arg6[%c0_22, %c0_23, %c0_24] : memref<9x4x4xbf16, #tpu.memory_space<vmem>>, vector<1x4x4xbf16>
    %40 = vector.shape_cast %39 : vector<1x4x4xbf16> to vector<4x4xbf16>
    %cst_25 = arith.constant dense<0.000000e+00> : vector<128x4xf32>
    %41 = tpu.matmul %38, %40, %cst_25 {dimension_numbers = #tpu.dot_dimension_numbers<[1], [0], [0], [1], [0, 0, 1, 1], [], []>} : vector<128x4xbf16>, vector<4x4xbf16>, vector<128x4xf32> -> vector<128x4xf32>
    %42 = arith.addf %36, %41 : vector<128x4xf32>
    %43 = vector.extract_strided_slice %35 {offsets = [0, 1, 0], sizes = [8, 16, 4], strides = [1, 1, 1]} : vector<10x18x4xbf16> to vector<8x16x4xbf16>
    %44 = vector.shape_cast %43 : vector<8x16x4xbf16> to vector<128x4xbf16>
    %c1 = arith.constant 1 : index
    %c0_26 = arith.constant 0 : index
    %c0_27 = arith.constant 0 : index
    %45 = vector.load %arg6[%c1, %c0_26, %c0_27] : memref<9x4x4xbf16, #tpu.memory_space<vmem>>, vector<1x4x4xbf16>
    %46 = vector.shape_cast %45 : vector<1x4x4xbf16> to vector<4x4xbf16>
    %cst_28 = arith.constant dense<0.000000e+00> : vector<128x4xf32>
    %47 = tpu.matmul %44, %46, %cst_28 {dimension_numbers = #tpu.dot_dimension_numbers<[1], [0], [0], [1], [0, 0, 1, 1], [], []>} : vector<128x4xbf16>, vector<4x4xbf16>, vector<128x4xf32> -> vector<128x4xf32>
    %48 = arith.addf %42, %47 : vector<128x4xf32>
    %49 = vector.extract_strided_slice %35 {offsets = [0, 2, 0], sizes = [8, 16, 4], strides = [1, 1, 1]} : vector<10x18x4xbf16> to vector<8x16x4xbf16>
    %50 = vector.shape_cast %49 : vector<8x16x4xbf16> to vector<128x4xbf16>
    %c2 = arith.constant 2 : index
    %c0_29 = arith.constant 0 : index
    %c0_30 = arith.constant 0 : index
    %51 = vector.load %arg6[%c2, %c0_29, %c0_30] : memref<9x4x4xbf16, #tpu.memory_space<vmem>>, vector<1x4x4xbf16>
    %52 = vector.shape_cast %51 : vector<1x4x4xbf16> to vector<4x4xbf16>
    %cst_31 = arith.constant dense<0.000000e+00> : vector<128x4xf32>
    %53 = tpu.matmul %50, %52, %cst_31 {dimension_numbers = #tpu.dot_dimension_numbers<[1], [0], [0], [1], [0, 0, 1, 1], [], []>} : vector<128x4xbf16>, vector<4x4xbf16>, vector<128x4xf32> -> vector<128x4xf32>
    %54 = arith.addf %48, %53 : vector<128x4xf32>
    %55 = vector.extract_strided_slice %35 {offsets = [1, 0, 0], sizes = [8, 16, 4], strides = [1, 1, 1]} : vector<10x18x4xbf16> to vector<8x16x4xbf16>
    %56 = vector.shape_cast %55 : vector<8x16x4xbf16> to vector<128x4xbf16>
    %c3 = arith.constant 3 : index
    %c0_32 = arith.constant 0 : index
    %c0_33 = arith.constant 0 : index
    %57 = vector.load %arg6[%c3, %c0_32, %c0_33] : memref<9x4x4xbf16, #tpu.memory_space<vmem>>, vector<1x4x4xbf16>
    %58 = vector.shape_cast %57 : vector<1x4x4xbf16> to vector<4x4xbf16>
    %cst_34 = arith.constant dense<0.000000e+00> : vector<128x4xf32>
    %59 = tpu.matmul %56, %58, %cst_34 {dimension_numbers = #tpu.dot_dimension_numbers<[1], [0], [0], [1], [0, 0, 1, 1], [], []>} : vector<128x4xbf16>, vector<4x4xbf16>, vector<128x4xf32> -> vector<128x4xf32>
    %60 = arith.addf %54, %59 : vector<128x4xf32>
    %61 = vector.extract_strided_slice %35 {offsets = [1, 1, 0], sizes = [8, 16, 4], strides = [1, 1, 1]} : vector<10x18x4xbf16> to vector<8x16x4xbf16>
    %62 = vector.shape_cast %61 : vector<8x16x4xbf16> to vector<128x4xbf16>
    %c4 = arith.constant 4 : index
    %c0_35 = arith.constant 0 : index
    %c0_36 = arith.constant 0 : index
    %63 = vector.load %arg6[%c4, %c0_35, %c0_36] : memref<9x4x4xbf16, #tpu.memory_space<vmem>>, vector<1x4x4xbf16>
    %64 = vector.shape_cast %63 : vector<1x4x4xbf16> to vector<4x4xbf16>
    %cst_37 = arith.constant dense<0.000000e+00> : vector<128x4xf32>
    %65 = tpu.matmul %62, %64, %cst_37 {dimension_numbers = #tpu.dot_dimension_numbers<[1], [0], [0], [1], [0, 0, 1, 1], [], []>} : vector<128x4xbf16>, vector<4x4xbf16>, vector<128x4xf32> -> vector<128x4xf32>
    %66 = arith.addf %60, %65 : vector<128x4xf32>
    %67 = vector.extract_strided_slice %35 {offsets = [1, 2, 0], sizes = [8, 16, 4], strides = [1, 1, 1]} : vector<10x18x4xbf16> to vector<8x16x4xbf16>
    %68 = vector.shape_cast %67 : vector<8x16x4xbf16> to vector<128x4xbf16>
    %c5 = arith.constant 5 : index
    %c0_38 = arith.constant 0 : index
    %c0_39 = arith.constant 0 : index
    %69 = vector.load %arg6[%c5, %c0_38, %c0_39] : memref<9x4x4xbf16, #tpu.memory_space<vmem>>, vector<1x4x4xbf16>
    %70 = vector.shape_cast %69 : vector<1x4x4xbf16> to vector<4x4xbf16>
    %cst_40 = arith.constant dense<0.000000e+00> : vector<128x4xf32>
    %71 = tpu.matmul %68, %70, %cst_40 {dimension_numbers = #tpu.dot_dimension_numbers<[1], [0], [0], [1], [0, 0, 1, 1], [], []>} : vector<128x4xbf16>, vector<4x4xbf16>, vector<128x4xf32> -> vector<128x4xf32>
    %72 = arith.addf %66, %71 : vector<128x4xf32>
    %73 = vector.extract_strided_slice %35 {offsets = [2, 0, 0], sizes = [8, 16, 4], strides = [1, 1, 1]} : vector<10x18x4xbf16> to vector<8x16x4xbf16>
    %74 = vector.shape_cast %73 : vector<8x16x4xbf16> to vector<128x4xbf16>
    %c6 = arith.constant 6 : index
    %c0_41 = arith.constant 0 : index
    %c0_42 = arith.constant 0 : index
    %75 = vector.load %arg6[%c6, %c0_41, %c0_42] : memref<9x4x4xbf16, #tpu.memory_space<vmem>>, vector<1x4x4xbf16>
    %76 = vector.shape_cast %75 : vector<1x4x4xbf16> to vector<4x4xbf16>
    %cst_43 = arith.constant dense<0.000000e+00> : vector<128x4xf32>
    %77 = tpu.matmul %74, %76, %cst_43 {dimension_numbers = #tpu.dot_dimension_numbers<[1], [0], [0], [1], [0, 0, 1, 1], [], []>} : vector<128x4xbf16>, vector<4x4xbf16>, vector<128x4xf32> -> vector<128x4xf32>
    %78 = arith.addf %72, %77 : vector<128x4xf32>
    %79 = vector.extract_strided_slice %35 {offsets = [2, 1, 0], sizes = [8, 16, 4], strides = [1, 1, 1]} : vector<10x18x4xbf16> to vector<8x16x4xbf16>
    %80 = vector.shape_cast %79 : vector<8x16x4xbf16> to vector<128x4xbf16>
    %c7 = arith.constant 7 : index
    %c0_44 = arith.constant 0 : index
    %c0_45 = arith.constant 0 : index
    %81 = vector.load %arg6[%c7, %c0_44, %c0_45] : memref<9x4x4xbf16, #tpu.memory_space<vmem>>, vector<1x4x4xbf16>
    %82 = vector.shape_cast %81 : vector<1x4x4xbf16> to vector<4x4xbf16>
    %cst_46 = arith.constant dense<0.000000e+00> : vector<128x4xf32>
    %83 = tpu.matmul %80, %82, %cst_46 {dimension_numbers = #tpu.dot_dimension_numbers<[1], [0], [0], [1], [0, 0, 1, 1], [], []>} : vector<128x4xbf16>, vector<4x4xbf16>, vector<128x4xf32> -> vector<128x4xf32>
    %84 = arith.addf %78, %83 : vector<128x4xf32>
    %85 = vector.extract_strided_slice %35 {offsets = [2, 2, 0], sizes = [8, 16, 4], strides = [1, 1, 1]} : vector<10x18x4xbf16> to vector<8x16x4xbf16>
    %86 = vector.shape_cast %85 : vector<8x16x4xbf16> to vector<128x4xbf16>
    %c8 = arith.constant 8 : index
    %c0_47 = arith.constant 0 : index
    %c0_48 = arith.constant 0 : index
    %87 = vector.load %arg6[%c8, %c0_47, %c0_48] : memref<9x4x4xbf16, #tpu.memory_space<vmem>>, vector<1x4x4xbf16>
    %88 = vector.shape_cast %87 : vector<1x4x4xbf16> to vector<4x4xbf16>
    %cst_49 = arith.constant dense<0.000000e+00> : vector<128x4xf32>
    %89 = tpu.matmul %86, %88, %cst_49 {dimension_numbers = #tpu.dot_dimension_numbers<[1], [0], [0], [1], [0, 0, 1, 1], [], []>} : vector<128x4xbf16>, vector<4x4xbf16>, vector<128x4xf32> -> vector<128x4xf32>
    %90 = arith.addf %84, %89 : vector<128x4xf32>
    %c0_50 = arith.constant 0 : index
    %c0_51 = arith.constant 0 : index
    %91 = vector.load %arg10[%c0_50, %c0_51] : memref<1x4xf32, #tpu.memory_space<vmem>>, vector<1x4xf32>
    %92 = vector.broadcast %91 : vector<1x4xf32> to vector<128x4xf32>
    %93 = arith.mulf %90, %92 : vector<128x4xf32>
    %c0_52 = arith.constant 0 : index
    %c0_53 = arith.constant 0 : index
    %94 = vector.load %arg11[%c0_52, %c0_53] : memref<1x4xf32, #tpu.memory_space<vmem>>, vector<1x4xf32>
    %95 = vector.broadcast %94 : vector<1x4xf32> to vector<128x4xf32>
    %96 = arith.addf %93, %95 : vector<128x4xf32>
    %cst_54 = arith.constant 0.000000e+00 : f32
    %97 = vector.broadcast %cst_54 : f32 to vector<128x4xf32>
    %98 = arith.maximumf %96, %97 : vector<128x4xf32>
    %99 = arith.truncf %98 : vector<128x4xf32> to vector<128x4xbf16>
    %c0_55 = arith.constant 0 : index
    %c0_56 = arith.constant 0 : index
    %100 = vector.load %arg7[%c0_55, %c0_56] : memref<4x16xbf16, #tpu.memory_space<vmem>>, vector<4x16xbf16>
    %cst_57 = arith.constant dense<0.000000e+00> : vector<128x16xf32>
    %101 = tpu.matmul %99, %100, %cst_57 {dimension_numbers = #tpu.dot_dimension_numbers<[1], [0], [0], [1], [0, 0, 1, 1], [], []>} : vector<128x4xbf16>, vector<4x16xbf16>, vector<128x16xf32> -> vector<128x16xf32>
    %102 = vector.shape_cast %1 : vector<8x16x16xbf16> to vector<128x16xbf16>
    %103 = arith.extf %102 : vector<128x16xbf16> to vector<128x16xf32>
    %c0_58 = arith.constant 0 : index
    %c0_59 = arith.constant 0 : index
    %104 = vector.load %arg12[%c0_58, %c0_59] : memref<1x16xf32, #tpu.memory_space<vmem>>, vector<1x16xf32>
    %105 = vector.broadcast %104 : vector<1x16xf32> to vector<128x16xf32>
    %106 = arith.mulf %101, %105 : vector<128x16xf32>
    %c0_60 = arith.constant 0 : index
    %c0_61 = arith.constant 0 : index
    %107 = vector.load %arg13[%c0_60, %c0_61] : memref<1x16xf32, #tpu.memory_space<vmem>>, vector<1x16xf32>
    %108 = vector.broadcast %107 : vector<1x16xf32> to vector<128x16xf32>
    %109 = arith.addf %106, %108 : vector<128x16xf32>
    %110 = arith.addf %109, %103 : vector<128x16xf32>
    %cst_62 = arith.constant 0.000000e+00 : f32
    %111 = vector.broadcast %cst_62 : f32 to vector<128x16xf32>
    %112 = arith.maximumf %110, %111 : vector<128x16xf32>
    %113 = vector.shape_cast %112 : vector<128x16xf32> to vector<1x8x16x16xf32>
    %c0_63 = arith.constant 0 : index
    %c0_64 = arith.constant 0 : index
    %c0_65 = arith.constant 0 : index
    %c0_66 = arith.constant 0 : index
    %114 = vector.load %arg14[%c0_63, %c0_64, %c0_65, %c0_66] : memref<1x8x16x16xf32, #tpu.memory_space<vmem>>, vector<1x8x16x16xf32>
    tpu.vector_store %arg14[%c0_63, %c0_64, %c0_65, %c0_66], %113 {strides = array<i32>} : memref<1x8x16x16xf32, #tpu.memory_space<vmem>>, vector<1x8x16x16xf32>,
    return
  }
  func.func @transform_0(%arg0: i32, %arg1: i32) -> (i32, i32, i32, i32) {
    %c0_i32 = arith.constant 0 : i32
    %c0_i32_0 = arith.constant 0 : i32
    %c0_i32_1 = arith.constant 0 : i32
    return %arg0, %arg1, %c0_i32, %c0_i32_0 : i32, i32, i32, i32
  }
  func.func @transform_1(%arg0: i32, %arg1: i32) -> (i32, i32, i32, i32) {
    %c8_i32 = arith.constant 8 : i32
    %0 = arith.muli %arg1, %c8_i32 : i32
    %c1_i32 = arith.constant 1 : i32
    %1 = arith.subi %0, %c1_i32 : i32
    %c0_i32 = arith.constant 0 : i32
    %2 = arith.maxsi %1, %c0_i32 : i32
    %c0_i32_0 = arith.constant 0 : i32
    %c0_i32_1 = arith.constant 0 : i32
    %c0_i32_2 = arith.constant 0 : i32
    return %arg0, %2, %c0_i32_0, %c0_i32_1 : i32, i32, i32, i32
  }
  func.func @transform_2(%arg0: i32, %arg1: i32) -> (i32, i32, i32, i32) {
    %c8_i32 = arith.constant 8 : i32
    %0 = arith.muli %arg1, %c8_i32 : i32
    %c8_i32_0 = arith.constant 8 : i32
    %1 = arith.addi %0, %c8_i32_0 : i32
    %c15_i32 = arith.constant 15 : i32
    %2 = arith.minsi %1, %c15_i32 : i32
    %c0_i32 = arith.constant 0 : i32
    %c0_i32_1 = arith.constant 0 : i32
    %c0_i32_2 = arith.constant 0 : i32
    return %arg0, %2, %c0_i32, %c0_i32_1 : i32, i32, i32, i32
  }
  func.func @transform_3(%arg0: i32, %arg1: i32) -> (i32, i32) {
    %c0_i32 = arith.constant 0 : i32
    %c0_i32_0 = arith.constant 0 : i32
    %c0_i32_1 = arith.constant 0 : i32
    return %c0_i32, %c0_i32_0 : i32, i32
  }
  func.func @transform_4(%arg0: i32, %arg1: i32) -> (i32, i32, i32) {
    %c0_i32 = arith.constant 0 : i32
    %c0_i32_0 = arith.constant 0 : i32
    %c0_i32_1 = arith.constant 0 : i32
    %c0_i32_2 = arith.constant 0 : i32
    return %c0_i32, %c0_i32_0, %c0_i32_1 : i32, i32, i32
  }
  func.func @transform_5(%arg0: i32, %arg1: i32) -> (i32, i32) {
    %c0_i32 = arith.constant 0 : i32
    %c0_i32_0 = arith.constant 0 : i32
    %c0_i32_1 = arith.constant 0 : i32
    return %c0_i32, %c0_i32_0 : i32, i32
  }
  func.func @transform_6(%arg0: i32, %arg1: i32) -> (i32, i32) {
    %c0_i32 = arith.constant 0 : i32
    %c0_i32_0 = arith.constant 0 : i32
    %c0_i32_1 = arith.constant 0 : i32
    return %c0_i32, %c0_i32_0 : i32, i32
  }
  func.func @transform_7(%arg0: i32, %arg1: i32) -> (i32, i32) {
    %c0_i32 = arith.constant 0 : i32
    %c0_i32_0 = arith.constant 0 : i32
    %c0_i32_1 = arith.constant 0 : i32
    return %c0_i32, %c0_i32_0 : i32, i32
  }
  func.func @transform_8(%arg0: i32, %arg1: i32) -> (i32, i32) {
    %c0_i32 = arith.constant 0 : i32
    %c0_i32_0 = arith.constant 0 : i32
    %c0_i32_1 = arith.constant 0 : i32
    return %c0_i32, %c0_i32_0 : i32, i32
  }
  func.func @transform_9(%arg0: i32, %arg1: i32) -> (i32, i32) {
    %c0_i32 = arith.constant 0 : i32
    %c0_i32_0 = arith.constant 0 : i32
    %c0_i32_1 = arith.constant 0 : i32
    return %c0_i32, %c0_i32_0 : i32, i32
  }
  func.func @transform_10(%arg0: i32, %arg1: i32) -> (i32, i32) {
    %c0_i32 = arith.constant 0 : i32
    %c0_i32_0 = arith.constant 0 : i32
    %c0_i32_1 = arith.constant 0 : i32
    return %c0_i32, %c0_i32_0 : i32, i32
  }
  func.func @transform_11(%arg0: i32, %arg1: i32) -> (i32, i32) {
    %c0_i32 = arith.constant 0 : i32
    %c0_i32_0 = arith.constant 0 : i32
    %c0_i32_1 = arith.constant 0 : i32
    return %c0_i32, %c0_i32_0 : i32, i32
  }
  func.func @transform_12(%arg0: i32, %arg1: i32) -> (i32, i32, i32, i32) {
    %c0_i32 = arith.constant 0 : i32
    %c0_i32_0 = arith.constant 0 : i32
    %c0_i32_1 = arith.constant 0 : i32
    return %arg0, %arg1, %c0_i32, %c0_i32_0 : i32, i32, i32, i32
  }
}

</mosaic_0001>

<llo_original>
// kernel: bottleneck_forward.1
$region0: #{bottleneck_forward.1}
  #allocation0 [shape = 'u32[]', space=smem, size = 0x4, offset = 0x4, fixed_abs, tag = 'smem constant byte address 0x4 - core index']
  #allocation1 [shape = 'u32[144,128]{1,0:T(1,128)}', space=vmem, size = 0x12000, scoped, tag = 'internal scratch']
  %s0 = inlined_call_operand.vmem [shape: bf16[2,16,16,16], index: 0, kind: input, shape index: {}, may-alias: {0,1,2}]
  %s1 = inlined_call_operand.vmem [shape: bf16[2,16,16,16], index: 1, kind: input, shape index: {}, may-alias: {0,1,2}]
  %s2 = inlined_call_operand.vmem [shape: bf16[2,16,16,16], index: 2, kind: input, shape index: {}, may-alias: {0,1,2}]
  %s3 = inlined_call_operand.vmem [shape: bf16[16,4], index: 3, kind: input, shape index: {}]
  %s4 = inlined_call_operand.vmem [shape: bf16[9,4,4], index: 4, kind: input, shape index: {}]
  %s5 = inlined_call_operand.vmem [shape: bf16[4,16], index: 5, kind: input, shape index: {}]
  %s6 = inlined_call_operand.vmem [shape: f32[1,4], index: 6, kind: input, shape index: {}]
  %s7 = inlined_call_operand.vmem [shape: f32[1,4], index: 7, kind: input, shape index: {}]
  %s8 = inlined_call_operand.vmem [shape: f32[1,4], index: 8, kind: input, shape index: {}]
  %s9 = inlined_call_operand.vmem [shape: f32[1,4], index: 9, kind: input, shape index: {}]
  %s10 = inlined_call_operand.vmem [shape: f32[1,16], index: 10, kind: input, shape index: {}]
  %s11 = inlined_call_operand.vmem [shape: f32[1,16], index: 11, kind: input, shape index: {}]
  %s12 = inlined_call_operand.vmem [shape: f32[2,16,16,16], index: 12, kind: output, shape index: {}]
  %s13 = sld [smem:[#allocation0]]
  $region81: #{bottleneck_forward.1} parent=0
    _
  %s15 = ssub.s32 1, %s13
  %s16 = scalar_select 0, %s15, %s13
  loop: start=0, step=1, limit=6
  $region2: #{bottleneck_forward.1} parent=0 // loop_pre_header
    _
  $region3: #{bottleneck_forward.1} parent=0 // loop_header
    %s18 = sphi 0, %s22
    %p19 = scmp.ge.s32.totalorder %s18, 6
    %s25 = sphi 0, %s37
    %s26 = sphi 0, %s33
    %s27 = sphi 0, %s25
    %s28 = sphi 0, %s26
    %s29 = sphi 0, %s27
    %s30 = sphi 0, %s28
    %s42 = sphi 0, %s44
    %s45 = sphi 0, %s42
    %s46 = sphi 0, %s45
    %s62 = sphi 0, %s46
    %s78 = sphi 0, %s80
    %s81 = sphi 0, %s78
    %s82 = sphi 0, %s81
    %s98 = sphi 0, %s82
    %s114 = sphi 0, %s116
    %s117 = sphi 0, %s114
    %s118 = sphi 0, %s117
    %s134 = sphi 0, %s118
    %s138 = sphi 0, %s138
    %s140 = sphi 0, %s138
    %s141 = sphi 0, %s140
    %s155 = sphi 0, %s141
    %s159 = sphi 0, %s159
    %s161 = sphi 0, %s159
    %s162 = sphi 0, %s161
    %s176 = sphi 0, %s162
    %s180 = sphi 0, %s180
    %s182 = sphi 0, %s180
    %s183 = sphi 0, %s182
    %s197 = sphi 0, %s183
    %s201 = sphi 0, %s201
    %s203 = sphi 0, %s201
    %s204 = sphi 0, %s203
    %s218 = sphi 0, %s204
    %s222 = sphi 0, %s222
    %s224 = sphi 0, %s222
    %s225 = sphi 0, %s224
    %s239 = sphi 0, %s225
    %s243 = sphi 0, %s243
    %s245 = sphi 0, %s243
    %s246 = sphi 0, %s245
    %s260 = sphi 0, %s246
    %s264 = sphi 0, %s264
    %s266 = sphi 0, %s264
    %s267 = sphi 0, %s266
    %s281 = sphi 0, %s267
    %s285 = sphi 0, %s285
    %s287 = sphi 0, %s285
    %s288 = sphi 0, %s287
    %s302 = sphi 0, %s288
    %s306 = sphi 0, %s306
    %s308 = sphi 0, %s306
    %s309 = sphi 0, %s308
    %s323 = sphi 0, %s309
    %s331 = sphi 0, %s333
    %s334 = sphi 0, %s331
    %s335 = sphi 0, %s334
    %s351 = sphi 0, %s335
  $region4: #{bottleneck_forward.1} parent=0 // loop_header_branch
    %21 = sbr.rel (%p19) target = $region8
  $region5: #{bottleneck_forward.1} parent=0 // loop_body
    %s23 = ssub.s32 %s18, 1
    %s24 = ssub.s32 %s18, 2
    %s31 = sadd.s32 1, %s26
    %p32 = scmp.ge.s32.totalorder %s31, 2
    %s33 = scalar_select %p32, 0, %s31
    %s34 = sadd.s32 1, %s25
    %s35 = scalar_select %p32, %s34, %s25
    %p36 = scmp.ge.s32.totalorder %s35, 2
    %s37 = scalar_select %p36, 0, %s35
    %s38 = ssub.s32 %s25, %s37
    %s39 = ssub.s32 %s26, %s33
    %s40 = sor.u32 %s38, %s39
    %p41 = scmp.eq.s32.totalorder %s40, 0
    %s43 = sadd.s32 %s42, 1
    %s44 = scalar_select %p41, %s42, %s43
    %p47 = pneg %p41
    %p48 = scmp.eq.s32.totalorder %s18, 3
    %p49 = por %p47, %p48
    %p50 = scmp.ne.s32.totalorder %s42, %s45
    %p51 = scmp.eq.s32.totalorder %s18, 0
    %p52 = por %p50, %p51
    %p53 = scmp.ne.s32.totalorder %s42, %s45
    %p54 = scmp.eq.s32.totalorder %s23, 3
    %p55 = por %p53, %p54
    %p56 = scmp.ne.s32.totalorder %s45, %s46
    %p57 = scmp.eq.s32.totalorder %s23, 0
    %p58 = por %p56, %p57
    %p59 = scmp.ne.s32.totalorder %s45, %s46
    %p60 = scmp.eq.s32.totalorder %s24, 3
    %p61 = por %p59, %p60
    %p63 = scmp.ne.s32.totalorder %s46, %s62
    %p64 = scmp.eq.s32.totalorder %s24, 0
    %p65 = por %p63, %p64
    %s66 = smul.u32 %s26, 8
    %s67 = ssub.s32 %s66, 1
    %p68 = scmp.gt.s32.totalorder %s67, 0
    %s69 = scalar_select %p68, %s67, 0
    %s70 = smul.u32 %s33, 8
    %s71 = ssub.s32 %s70, 1
    %p72 = scmp.gt.s32.totalorder %s71, 0
    %s73 = scalar_select %p72, %s71, 0
    %s74 = ssub.s32 %s25, %s37
    %s75 = ssub.s32 %s69, %s73
    %s76 = sor.u32 %s74, %s75
    %p77 = scmp.eq.s32.totalorder %s76, 0
    %s79 = sadd.s32 %s78, 1
    %s80 = scalar_select %p77, %s78, %s79
    %p83 = pneg %p77
    %p84 = scmp.eq.s32.totalorder %s18, 3
    %p85 = por %p83, %p84
    %p86 = scmp.ne.s32.totalorder %s78, %s81
    %p87 = scmp.eq.s32.totalorder %s18, 0
    %p88 = por %p86, %p87
    %p89 = scmp.ne.s32.totalorder %s78, %s81
    %p90 = scmp.eq.s32.totalorder %s23, 3
    %p91 = por %p89, %p90
    %p92 = scmp.ne.s32.totalorder %s81, %s82
    %p93 = scmp.eq.s32.totalorder %s23, 0
    %p94 = por %p92, %p93
    %p95 = scmp.ne.s32.totalorder %s81, %s82
    %p96 = scmp.eq.s32.totalorder %s24, 3
    %p97 = por %p95, %p96
    %p99 = scmp.ne.s32.totalorder %s82, %s98
    %p100 = scmp.eq.s32.totalorder %s24, 0
    %p101 = por %p99, %p100
    %s102 = smul.u32 %s26, 8
    %s103 = sadd.s32 %s102, 8
    %p104 = scmp.lt.s32.totalorder %s103, 15
    %s105 = scalar_select %p104, %s103, 15
    %s106 = smul.u32 %s33, 8
    %s107 = sadd.s32 %s106, 8
    %p108 = scmp.lt.s32.totalorder %s107, 15
    %s109 = scalar_select %p108, %s107, 15
    %s110 = ssub.s32 %s25, %s37
    %s111 = ssub.s32 %s105, %s109
    %s112 = sor.u32 %s110, %s111
    %p113 = scmp.eq.s32.totalorder %s112, 0
    %s115 = sadd.s32 %s114, 1
    %s116 = scalar_select %p113, %s114, %s115
    %p119 = pneg %p113
    %p120 = scmp.eq.s32.totalorder %s18, 3
    %p121 = por %p119, %p120
    %p122 = scmp.ne.s32.totalorder %s114, %s117
    %p123 = scmp.eq.s32.totalorder %s18, 0
    %p124 = por %p122, %p123
    %p125 = scmp.ne.s32.totalorder %s114, %s117
    %p126 = scmp.eq.s32.totalorder %s23, 3
    %p127 = por %p125, %p126
    %p128 = scmp.ne.s32.totalorder %s117, %s118
    %p129 = scmp.eq.s32.totalorder %s23, 0
    %p130 = por %p128, %p129
    %p131 = scmp.ne.s32.totalorder %s117, %s118
    %p132 = scmp.eq.s32.totalorder %s24, 3
    %p133 = por %p131, %p132
    %p135 = scmp.ne.s32.totalorder %s118, %s134
    %p136 = scmp.eq.s32.totalorder %s24, 0
    %p137 = por %p135, %p136
    %s139 = sadd.s32 %s138, 1
    %p142 = scmp.eq.s32.totalorder %s18, 3
    %p143 = scmp.ne.s32.totalorder %s138, %s140
    %p144 = scmp.eq.s32.totalorder %s18, 0
    %p145 = por %p143, %p144
    %p146 = scmp.ne.s32.totalorder %s138, %s140
    %p147 = scmp.eq.s32.totalorder %s23, 3
    %p148 = por %p146, %p147
    %p149 = scmp.ne.s32.totalorder %s140, %s141
    %p150 = scmp.eq.s32.totalorder %s23, 0
    %p151 = por %p149, %p150
    %p152 = scmp.ne.s32.totalorder %s140, %s141
    %p153 = scmp.eq.s32.totalorder %s24, 3
    %p154 = por %p152, %p153
    %p156 = scmp.ne.s32.totalorder %s141, %s155
    %p157 = scmp.eq.s32.totalorder %s24, 0
    %p158 = por %p156, %p157
    %s160 = sadd.s32 %s159, 1
    %p163 = scmp.eq.s32.totalorder %s18, 3
    %p164 = scmp.ne.s32.totalorder %s159, %s161
    %p165 = scmp.eq.s32.totalorder %s18, 0
    %p166 = por %p164, %p165
    %p167 = scmp.ne.s32.totalorder %s159, %s161
    %p168 = scmp.eq.s32.totalorder %s23, 3
    %p169 = por %p167, %p168
    %p170 = scmp.ne.s32.totalorder %s161, %s162
    %p171 = scmp.eq.s32.totalorder %s23, 0
    %p172 = por %p170, %p171
    %p173 = scmp.ne.s32.totalorder %s161, %s162
    %p174 = scmp.eq.s32.totalorder %s24, 3
    %p175 = por %p173, %p174
    %p177 = scmp.ne.s32.totalorder %s162, %s176
    %p178 = scmp.eq.s32.totalorder %s24, 0
    %p179 = por %p177, %p178
    %s181 = sadd.s32 %s180, 1
    %p184 = scmp.eq.s32.totalorder %s18, 3
    %p185 = scmp.ne.s32.totalorder %s180, %s182
    %p186 = scmp.eq.s32.totalorder %s18, 0
    %p187 = por %p185, %p186
    %p188 = scmp.ne.s32.totalorder %s180, %s182
    %p189 = scmp.eq.s32.totalorder %s23, 3
    %p190 = por %p188, %p189
    %p191 = scmp.ne.s32.totalorder %s182, %s183
    %p192 = scmp.eq.s32.totalorder %s23, 0
    %p193 = por %p191, %p192
    %p194 = scmp.ne.s32.totalorder %s182, %s183
    %p195 = scmp.eq.s32.totalorder %s24, 3
    %p196 = por %p194, %p195
    %p198 = scmp.ne.s32.totalorder %s183, %s197
    %p199 = scmp.eq.s32.totalorder %s24, 0
    %p200 = por %p198, %p199
    %s202 = sadd.s32 %s201, 1
    %p205 = scmp.eq.s32.totalorder %s18, 3
    %p206 = scmp.ne.s32.totalorder %s201, %s203
    %p207 = scmp.eq.s32.totalorder %s18, 0
    %p208 = por %p206, %p207
    %p209 = scmp.ne.s32.totalorder %s201, %s203
    %p210 = scmp.eq.s32.totalorder %s23, 3
    %p211 = por %p209, %p210
    %p212 = scmp.ne.s32.totalorder %s203, %s204
    %p213 = scmp.eq.s32.totalorder %s23, 0
    %p214 = por %p212, %p213
    %p215 = scmp.ne.s32.totalorder %s203, %s204
    %p216 = scmp.eq.s32.totalorder %s24, 3
    %p217 = por %p215, %p216
    %p219 = scmp.ne.s32.totalorder %s204, %s218
    %p220 = scmp.eq.s32.totalorder %s24, 0
    %p221 = por %p219, %p220
    %s223 = sadd.s32 %s222, 1
    %p226 = scmp.eq.s32.totalorder %s18, 3
    %p227 = scmp.ne.s32.totalorder %s222, %s224
    %p228 = scmp.eq.s32.totalorder %s18, 0
    %p229 = por %p227, %p228
    %p230 = scmp.ne.s32.totalorder %s222, %s224
    %p231 = scmp.eq.s32.totalorder %s23, 3
    %p232 = por %p230, %p231
    %p233 = scmp.ne.s32.totalorder %s224, %s225
    %p234 = scmp.eq.s32.totalorder %s23, 0
    %p235 = por %p233, %p234
    %p236 = scmp.ne.s32.totalorder %s224, %s225
    %p237 = scmp.eq.s32.totalorder %s24, 3
    %p238 = por %p236, %p237
    %p240 = scmp.ne.s32.totalorder %s225, %s239
    %p241 = scmp.eq.s32.totalorder %s24, 0
    %p242 = por %p240, %p241
    %s244 = sadd.s32 %s243, 1
    %p247 = scmp.eq.s32.totalorder %s18, 3
    %p248 = scmp.ne.s32.totalorder %s243, %s245
    %p249 = scmp.eq.s32.totalorder %s18, 0
    %p250 = por %p248, %p249
    %p251 = scmp.ne.s32.totalorder %s243, %s245
    %p252 = scmp.eq.s32.totalorder %s23, 3
    %p253 = por %p251, %p252
    %p254 = scmp.ne.s32.totalorder %s245, %s246
    %p255 = scmp.eq.s32.totalorder %s23, 0
    %p256 = por %p254, %p255
    %p257 = scmp.ne.s32.totalorder %s245, %s246
    %p258 = scmp.eq.s32.totalorder %s24, 3
    %p259 = por %p257, %p258
    %p261 = scmp.ne.s32.totalorder %s246, %s260
    %p262 = scmp.eq.s32.totalorder %s24, 0
    %p263 = por %p261, %p262
    %s265 = sadd.s32 %s264, 1
    %p268 = scmp.eq.s32.totalorder %s18, 3
    %p269 = scmp.ne.s32.totalorder %s264, %s266
    %p270 = scmp.eq.s32.totalorder %s18, 0
    %p271 = por %p269, %p270
    %p272 = scmp.ne.s32.totalorder %s264, %s266
    %p273 = scmp.eq.s32.totalorder %s23, 3
    %p274 = por %p272, %p273
    %p275 = scmp.ne.s32.totalorder %s266, %s267
    %p276 = scmp.eq.s32.totalorder %s23, 0
    %p277 = por %p275, %p276
    %p278 = scmp.ne.s32.totalorder %s266, %s267
    %p279 = scmp.eq.s32.totalorder %s24, 3
    %p280 = por %p278, %p279
    %p282 = scmp.ne.s32.totalorder %s267, %s281
    %p283 = scmp.eq.s32.totalorder %s24, 0
    %p284 = por %p282, %p283
    %s286 = sadd.s32 %s285, 1
    %p289 = scmp.eq.s32.totalorder %s18, 3
    %p290 = scmp.ne.s32.totalorder %s285, %s287
    %p291 = scmp.eq.s32.totalorder %s18, 0
    %p292 = por %p290, %p291
    %p293 = scmp.ne.s32.totalorder %s285, %s287
    %p294 = scmp.eq.s32.totalorder %s23, 3
    %p295 = por %p293, %p294
    %p296 = scmp.ne.s32.totalorder %s287, %s288
    %p297 = scmp.eq.s32.totalorder %s23, 0
    %p298 = por %p296, %p297
    %p299 = scmp.ne.s32.totalorder %s287, %s288
    %p300 = scmp.eq.s32.totalorder %s24, 3
    %p301 = por %p299, %p300
    %p303 = scmp.ne.s32.totalorder %s288, %s302
    %p304 = scmp.eq.s32.totalorder %s24, 0
    %p305 = por %p303, %p304
    %s307 = sadd.s32 %s306, 1
    %p310 = scmp.eq.s32.totalorder %s18, 3
    %p311 = scmp.ne.s32.totalorder %s306, %s308
    %p312 = scmp.eq.s32.totalorder %s18, 0
    %p313 = por %p311, %p312
    %p314 = scmp.ne.s32.totalorder %s306, %s308
    %p315 = scmp.eq.s32.totalorder %s23, 3
    %p316 = por %p314, %p315
    %p317 = scmp.ne.s32.totalorder %s308, %s309
    %p318 = scmp.eq.s32.totalorder %s23, 0
    %p319 = por %p317, %p318
    %p320 = scmp.ne.s32.totalorder %s308, %s309
    %p321 = scmp.eq.s32.totalorder %s24, 3
    %p322 = por %p320, %p321
    %p324 = scmp.ne.s32.totalorder %s309, %s323
    %p325 = scmp.eq.s32.totalorder %s24, 0
    %p326 = por %p324, %p325
    %s327 = ssub.s32 %s25, %s37
    %s328 = ssub.s32 %s26, %s33
    %s329 = sor.u32 %s327, %s328
    %p330 = scmp.eq.s32.totalorder %s329, 0
    %s332 = sadd.s32 %s331, 1
    %s333 = scalar_select %p330, %s331, %s332
    %p336 = pneg %p330
    %p337 = scmp.eq.s32.totalorder %s18, 3
    %p338 = por %p336, %p337
    %p339 = scmp.ne.s32.totalorder %s331, %s334
    %p340 = scmp.eq.s32.totalorder %s18, 0
    %p341 = por %p339, %p340
    %p342 = scmp.ne.s32.totalorder %s331, %s334
    %p343 = scmp.eq.s32.totalorder %s23, 3
    %p344 = por %p342, %p343
    %p345 = scmp.ne.s32.totalorder %s334, %s335
    %p346 = scmp.eq.s32.totalorder %s23, 0
    %p347 = por %p345, %p346
    %p348 = scmp.ne.s32.totalorder %s334, %s335
    %p349 = scmp.eq.s32.totalorder %s24, 3
    %p350 = por %p348, %p349
    %p352 = scmp.ne.s32.totalorder %s335, %s351
    %p353 = scmp.eq.s32.totalorder %s24, 0
    %p354 = por %p352, %p353
    %p355 = scmp.le.s32.totalorder 1, %s18
    %p356 = scmp.lt.s32.totalorder %s18, 5
    %p357 = pnand %p355, %p356
    %p358 = pneg %p357
    // Predicated region
    $region9: #{bottleneck_forward.1} parent=5 // pred_check
      _
    $region10: #{bottleneck_forward.1} parent=5 // pred_check_branch
      %360 = sbr.rel (%p357) target = $region12
    $region11: #{bottleneck_forward.1} parent=5 // pred_region
      %s361 = ssub.s32 %s18, 1
      // Predicated region
      $region13: #{bottleneck_forward.1} parent=11 // pred_check
        %p362 = pneg %p151
      $region14: #{bottleneck_forward.1} parent=11 // pred_check_branch
        %364 = sbr.rel (%p362) target = $region16
      $region15: #{bottleneck_forward.1} parent=11 // pred_region
        _
      $region16: #{bottleneck_forward.1} parent=11 // pred_fallthru
        _
      // Predicated region
      $region17: #{bottleneck_forward.1} parent=11 // pred_check
        %p365 = pneg %p172
      $region18: #{bottleneck_forward.1} parent=11 // pred_check_branch
        %367 = sbr.rel (%p365) target = $region20
      $region19: #{bottleneck_forward.1} parent=11 // pred_region
        _
      $region20: #{bottleneck_forward.1} parent=11 // pred_fallthru
        _
      // Predicated region
      $region21: #{bottleneck_forward.1} parent=11 // pred_check
        %p368 = pneg %p193
      $region22: #{bottleneck_forward.1} parent=11 // pred_check_branch
        %370 = sbr.rel (%p368) target = $region24
      $region23: #{bottleneck_forward.1} parent=11 // pred_region
        _
      $region24: #{bottleneck_forward.1} parent=11 // pred_fallthru
        _
      // Predicated region
      $region25: #{bottleneck_forward.1} parent=11 // pred_check
        %p371 = pneg %p214
      $region26: #{bottleneck_forward.1} parent=11 // pred_check_branch
        %373 = sbr.rel (%p371) target = $region28
      $region27: #{bottleneck_forward.1} parent=11 // pred_region
        _
      $region28: #{bottleneck_forward.1} parent=11 // pred_fallthru
        _
      // Predicated region
      $region29: #{bottleneck_forward.1} parent=11 // pred_check
        %p374 = pneg %p235
      $region30: #{bottleneck_forward.1} parent=11 // pred_check_branch
        %376 = sbr.rel (%p374) target = $region32
      $region31: #{bottleneck_forward.1} parent=11 // pred_region
        _
      $region32: #{bottleneck_forward.1} parent=11 // pred_fallthru
        _
      // Predicated region
      $region33: #{bottleneck_forward.1} parent=11 // pred_check
        %p377 = pneg %p256
      $region34: #{bottleneck_forward.1} parent=11 // pred_check_branch
        %379 = sbr.rel (%p377) target = $region36
      $region35: #{bottleneck_forward.1} parent=11 // pred_region
        _
      $region36: #{bottleneck_forward.1} parent=11 // pred_fallthru
        _
      // Predicated region
      $region37: #{bottleneck_forward.1} parent=11 // pred_check
        %p380 = pneg %p277
      $region38: #{bottleneck_forward.1} parent=11 // pred_check_branch
        %382 = sbr.rel (%p380) target = $region40
      $region39: #{bottleneck_forward.1} parent=11 // pred_region
        _
      $region40: #{bottleneck_forward.1} parent=11 // pred_fallthru
        _
      // Predicated region
      $region41: #{bottleneck_forward.1} parent=11 // pred_check
        %p383 = pneg %p298
      $region42: #{bottleneck_forward.1} parent=11 // pred_check_branch
        %385 = sbr.rel (%p383) target = $region44
      $region43: #{bottleneck_forward.1} parent=11 // pred_region
        _
      $region44: #{bottleneck_forward.1} parent=11 // pred_fallthru
        _
      // Predicated region
      $region45: #{bottleneck_forward.1} parent=11 // pred_check
        %p386 = pneg %p319
      $region46: #{bottleneck_forward.1} parent=11 // pred_check_branch
        %388 = sbr.rel (%p386) target = $region48
      $region47: #{bottleneck_forward.1} parent=11 // pred_region
        _
      $region48: #{bottleneck_forward.1} parent=11 // pred_fallthru
        _
    $region12: #{bottleneck_forward.1} parent=5 // pred_fallthru
      _
    %p389 = scmp.lt.s32.totalorder %s18, 4
    // Predicated region
    $region49: #{bottleneck_forward.1} parent=5 // pred_check
      %p390 = pneg %p389
    $region50: #{bottleneck_forward.1} parent=5 // pred_check_branch
      %392 = sbr.rel (%p390) target = $region52
    $region51: #{bottleneck_forward.1} parent=5 // pred_region
      // Predicated region
      $region53: #{bottleneck_forward.1} parent=51 // pred_check
        %p393 = pneg %p52
      $region54: #{bottleneck_forward.1} parent=51 // pred_check_branch
        %395 = sbr.rel (%p393) target = $region56
      $region55: #{bottleneck_forward.1} parent=51 // pred_region
        %s396 = smul.u32 8, %s26
        %p397 = scmp.lt.s32.totalorder %s25, 1
        %s398 = scalar_select %p397, %s25, 1
        %p399 = scmp.lt.s32.totalorder %s396, 15
        %s400 = scalar_select %p399, %s396, 15
        %s401 = smul.addr %s400, 2
        %s402 = smul.addr %s398, 32
        %s403 = sadd.s32 %s401, %s402
        %s404 = smul.addr %s403, 4
        %s405 = scalar_lea.vmem %s0, %s404
        %s406 = smul.u32 8, %s26
      $region56: #{bottleneck_forward.1} parent=51 // pred_fallthru
        _
      // Predicated region
      $region57: #{bottleneck_forward.1} parent=51 // pred_check
        %p407 = pneg %p88
      $region58: #{bottleneck_forward.1} parent=51 // pred_check_branch
        %409 = sbr.rel (%p407) target = $region60
      $region59: #{bottleneck_forward.1} parent=51 // pred_region
        %s410 = smul.u32 %s26, 8
        %s411 = ssub.s32 %s410, 1
        %p412 = scmp.gt.s32.totalorder %s411, 0
        %s413 = scalar_select %p412, %s411, 0
        %p414 = scmp.lt.s32.totalorder %s25, 1
        %s415 = scalar_select %p414, %s25, 1
        %p416 = scmp.lt.s32.totalorder %s413, 15
        %s417 = scalar_select %p416, %s413, 15
        %s418 = smul.addr %s417, 2
        %s419 = smul.addr %s415, 32
        %s420 = sadd.s32 %s418, %s419
        %s421 = smul.addr %s420, 4
        %s422 = scalar_lea.vmem %s1, %s421
        %s423 = smul.u32 %s26, 8
        %s424 = ssub.s32 %s423, 1
        %p425 = scmp.gt.s32.totalorder %s424, 0
        %s426 = scalar_select %p425, %s424, 0
      $region60: #{bottleneck_forward.1} parent=51 // pred_fallthru
        _
      // Predicated region
      $region61: #{bottleneck_forward.1} parent=51 // pred_check
        %p427 = pneg %p124
      $region62: #{bottleneck_forward.1} parent=51 // pred_check_branch
        %429 = sbr.rel (%p427) target = $region64
      $region63: #{bottleneck_forward.1} parent=51 // pred_region
        %s430 = smul.u32 %s26, 8
        %s431 = sadd.s32 %s430, 8
        %p432 = scmp.lt.s32.totalorder %s431, 15
        %s433 = scalar_select %p432, %s431, 15
        %p434 = scmp.lt.s32.totalorder %s25, 1
        %s435 = scalar_select %p434, %s25, 1
        %p436 = scmp.lt.s32.totalorder %s433, 15
        %s437 = scalar_select %p436, %s433, 15
        %s438 = smul.addr %s437, 2
        %s439 = smul.addr %s435, 32
        %s440 = sadd.s32 %s438, %s439
        %s441 = smul.addr %s440, 4
        %s442 = scalar_lea.vmem %s2, %s441
        %s443 = smul.u32 %s26, 8
        %s444 = sadd.s32 %s443, 8
        %p445 = scmp.lt.s32.totalorder %s444, 15
        %s446 = scalar_select %p445, %s444, 15
      $region64: #{bottleneck_forward.1} parent=51 // pred_fallthru
        _
    $region52: #{bottleneck_forward.1} parent=5 // pred_fallthru
      _
    %p447 = scmp.le.s32.totalorder 1, %s18
    %p448 = scmp.lt.s32.totalorder %s18, 5
    %p449 = pnand %p447, %p448
    %p450 = pneg %p449
    // Predicated region
    $region65: #{bottleneck_forward.1} parent=5 // pred_check
      _
    $region66: #{bottleneck_forward.1} parent=5 // pred_check_branch
      %452 = sbr.rel (%p449) target = $region68
    $region67: #{bottleneck_forward.1} parent=5 // pred_region
      %s453 = ssub.s32 %s18, 1
      %s454 = smul.u32 8, %s28
      %p455 = scmp.lt.s32.totalorder %s27, 1
      %s456 = scalar_select %p455, %s27, 1
      %p457 = scmp.lt.s32.totalorder %s454, 15
      %s458 = scalar_select %p457, %s454, 15
      %s459 = smul.addr %s458, 2
      %s460 = smul.addr %s456, 32
      %s461 = sadd.s32 %s459, %s460
      %s462 = smul.addr %s461, 4
      %s463 = scalar_lea.vmem %s0, %s462
      %p464 = pneg %p58
      %p465 = pneg %p55
      %s466 = smul.u32 %s28, 8
      %s467 = ssub.s32 %s466, 1
      %p468 = scmp.gt.s32.totalorder %s467, 0
      %s469 = scalar_select %p468, %s467, 0
      %p470 = scmp.lt.s32.totalorder %s27, 1
      %s471 = scalar_select %p470, %s27, 1
      %p472 = scmp.lt.s32.totalorder %s469, 15
      %s473 = scalar_select %p472, %s469, 15
      %s474 = smul.addr %s473, 2
      %s475 = smul.addr %s471, 32
      %s476 = sadd.s32 %s474, %s475
      %s477 = smul.addr %s476, 4
      %s478 = scalar_lea.vmem %s1, %s477
      %p479 = pneg %p94
      %p480 = pneg %p91
      %s481 = smul.u32 %s28, 8
      %s482 = sadd.s32 %s481, 8
      %p483 = scmp.lt.s32.totalorder %s482, 15
      %s484 = scalar_select %p483, %s482, 15
      %p485 = scmp.lt.s32.totalorder %s27, 1
      %s486 = scalar_select %p485, %s27, 1
      %p487 = scmp.lt.s32.totalorder %s484, 15
      %s488 = scalar_select %p487, %s484, 15
      %s489 = smul.addr %s488, 2
      %s490 = smul.addr %s486, 32
      %s491 = sadd.s32 %s489, %s490
      %s492 = smul.addr %s491, 4
      %s493 = scalar_lea.vmem %s2, %s492
      %p494 = pneg %p130
      %p495 = pneg %p127
      %p496 = pneg %p151
      %p497 = pneg %p148
      %p498 = pneg %p172
      %p499 = pneg %p169
      %p500 = pneg %p193
      %p501 = pneg %p190
      %p502 = pneg %p214
      %p503 = pneg %p211
      %p504 = pneg %p235
      %p505 = pneg %p232
      %p506 = pneg %p256
      %p507 = pneg %p253
      %p508 = pneg %p277
      %p509 = pneg %p274
      %p510 = pneg %p298
      %p511 = pneg %p295
      %p512 = pneg %p319
      %p513 = pneg %p316
      %p514 = pneg %p347
      %p515 = pneg %p344
      %s516 = smul.u32 8, %s28
      %p517 = scmp.lt.s32.totalorder %s27, 1
      %s518 = scalar_select %p517, %s27, 1
      %p519 = scmp.lt.s32.totalorder %s516, 15
      %s520 = scalar_select %p519, %s516, 15
      %s521 = smul.addr %s520, 2
      %s522 = smul.addr %s518, 32
      %s523 = sadd.s32 %s521, %s522
      %s524 = smul.addr %s523, 8
      %s525 = scalar_lea.vmem %s12, %s524
      %s526 = smul.u32 8, %s28
      %p527 = scmp.lt.s32.totalorder %s27, 1
      %s528 = scalar_select %p527, %s27, 1
      %p529 = scmp.lt.s32.totalorder %s526, 15
      %s530 = scalar_select %p529, %s526, 15
      %s531 = smul.addr %s530, 2
      %s532 = smul.addr %s528, 32
      %s533 = sadd.s32 %s531, %s532
      %s534 = smul.addr %s533, 4
      %s535 = scalar_lea.vmem %s0, %s534
      %s536 = smul.u32 8, %s28
      %s537 = smul.u32 %s28, 8
      %s538 = ssub.s32 %s537, 1
      %p539 = scmp.gt.s32.totalorder %s538, 0
      %s540 = scalar_select %p539, %s538, 0
      %p541 = scmp.lt.s32.totalorder %s27, 1
      %s542 = scalar_select %p541, %s27, 1
      %p543 = scmp.lt.s32.totalorder %s540, 15
      %s544 = scalar_select %p543, %s540, 15
      %s545 = smul.addr %s544, 2
      %s546 = smul.addr %s542, 32
      %s547 = sadd.s32 %s545, %s546
      %s548 = smul.addr %s547, 4
      %s549 = scalar_lea.vmem %s1, %s548
      %s550 = smul.u32 %s28, 8
      %s551 = ssub.s32 %s550, 1
      %p552 = scmp.gt.s32.totalorder %s551, 0
      %s553 = scalar_select %p552, %s551, 0
      %s554 = smul.u32 %s28, 8
      %s555 = sadd.s32 %s554, 8
      %p556 = scmp.lt.s32.totalorder %s555, 15
      %s557 = scalar_select %p556, %s555, 15
      %p558 = scmp.lt.s32.totalorder %s27, 1
      %s559 = scalar_select %p558, %s27, 1
      %p560 = scmp.lt.s32.totalorder %s557, 15
      %s561 = scalar_select %p560, %s557, 15
      %s562 = smul.addr %s561, 2
      %s563 = smul.addr %s559, 32
      %s564 = sadd.s32 %s562, %s563
      %s565 = smul.addr %s564, 4
      %s566 = scalar_lea.vmem %s2, %s565
      %s567 = smul.u32 %s28, 8
      %s568 = sadd.s32 %s567, 8
      %p569 = scmp.lt.s32.totalorder %s568, 15
      %s570 = scalar_select %p569, %s568, 15
      %s571 = smul.u32 8, %s28
      %p572 = scmp.lt.s32.totalorder %s27, 1
      %s573 = scalar_select %p572, %s27, 1
      %p574 = scmp.lt.s32.totalorder %s571, 15
      %s575 = scalar_select %p574, %s571, 15
      %s576 = smul.addr %s575, 2
      %s577 = smul.addr %s573, 32
      %s578 = sadd.s32 %s576, %s577
      %s579 = smul.addr %s578, 8
      %s580 = scalar_lea.vmem %s12, %s579
      %s581 = smul.u32 8, %s28
      %v583 = vld [vmem:[%s535] sm:$0xf]
      %v584 = vld [vmem:[%s535 + $0x4] sm:$0xf]
      %v585 = vld [vmem:[%s535 + $0x8] sm:$0xf]
      %v586 = vld [vmem:[%s535 + $0xc] sm:$0xf]
      %v587 = vld [vmem:[%s535 + $0x10] sm:$0xf]
      %v588 = vld [vmem:[%s535 + $0x14] sm:$0xf]
      %v589 = vld [vmem:[%s535 + $0x18] sm:$0xf]
      %v590 = vld [vmem:[%s535 + $0x1c] sm:$0xf]
      %v591 = vld [vmem:[%s535 + $0x20] sm:$0xf]
      %v592 = vld [vmem:[%s535 + $0x24] sm:$0xf]
      %v593 = vld [vmem:[%s535 + $0x28] sm:$0xf]
      %v594 = vld [vmem:[%s535 + $0x2c] sm:$0xf]
      %v595 = vld [vmem:[%s535 + $0x30] sm:$0xf]
      %v596 = vld [vmem:[%s535 + $0x34] sm:$0xf]
      %v597 = vld [vmem:[%s535 + $0x38] sm:$0xf]
      %v598 = vld [vmem:[%s535 + $0x3c] sm:$0xf]
      %v599 = vld [vmem:[%s549] sm:$0xf]
      %v600 = vld [vmem:[%s549 + $0x4] sm:$0xf]
      %v601 = vld [vmem:[%s566] sm:$0xf]
      %v602 = vld [vmem:[%s566 + $0x4] sm:$0xf]
      %v603 = vld [vmem:[%s3] sm:$0xf]
      %v604 = vld [vmem:[%s3 + $0x4] sm:$0xf]
      %v625 = vunpack.c.l.b16 %v599
      %v626 = vunpack.c.l.b16 %v600
      %v627 = vunpack.c.l.b16 %v583
      %v628 = vunpack.c.l.b16 %v584
      %v629 = vunpack.c.l.b16 %v585
      %v630 = vunpack.c.l.b16 %v586
      %v631 = vunpack.c.l.b16 %v587
      %v632 = vunpack.c.l.b16 %v588
      %v633 = vunpack.c.l.b16 %v589
      %v634 = vunpack.c.l.b16 %v590
      %v635 = vunpack.c.l.b16 %v591
      %v636 = vunpack.c.l.b16 %v592
      %v637 = vunpack.c.l.b16 %v593
      %v638 = vunpack.c.l.b16 %v594
      %v639 = vunpack.c.l.b16 %v595
      %v640 = vunpack.c.l.b16 %v596
      %v641 = vunpack.c.l.b16 %v597
      %v642 = vunpack.c.l.b16 %v598
      %v643 = vunpack.c.l.b16 %v601
      %v644 = vunpack.c.l.b16 %v602
      %v645 = vpack.c.b16 %v626, %v625
      %v646 = vpack.c.b16 %v628, %v627
      %v647 = vpack.c.b16 %v630, %v629
      %v648 = vpack.c.b16 %v632, %v631
      %v649 = vpack.c.b16 %v634, %v633
      %v650 = vpack.c.b16 %v636, %v635
      %v651 = vpack.c.b16 %v638, %v637
      %v652 = vpack.c.b16 %v640, %v639
      %v653 = vpack.c.b16 %v642, %v641
      %v654 = vpack.c.b16 %v644, %v643
      %v657 = vunpack.c.l.b16 %v603
      %v658 = vunpack.c.l.b16 %v604
      %v659 = vpack.c.b16 %v658, %v657
      %vm661 = vcmask 130048
      %v663 = vsel %vm661, %v645, 0
      %v666 = vsel %vm661, %v646, 0
      %v669 = vsel %vm661, %v647, 0
      %v672 = vsel %vm661, %v648, 0
      %v675 = vsel %vm661, %v649, 0
      %v678 = vsel %vm661, %v650, 0
      %v681 = vsel %vm661, %v651, 0
      %v684 = vsel %vm661, %v652, 0
      %v687 = vsel %vm661, %v653, 0
      %v690 = vsel %vm661, %v654, 0
      %692 = vmatprep.subr.bf16.mxu0 0
      %693 = vmatpush1.bf16.msra.mxu0 0
      %694 = vmatprep.subr.bf16.mxu0 0
      %695 = vmatpush1.bf16.msra.mxu0 0
      %696 = vmatprep.subr.bf16.mxu0 0
      %697 = vmatpush1.bf16.msra.mxu0 0
      %698 = vmatprep.subr.bf16.mxu0 0
      %699 = vmatpush1.bf16.msra.mxu0 0
      %700 = vmatprep.subr.bf16.mxu0 0
      %701 = vmatpush1.bf16.msra.mxu0 0
      %702 = vmatprep.subr.bf16.mxu0 0
      %703 = vmatpush1.bf16.msra.mxu0 0
      %704 = vmatprep.subr.bf16.mxu0 0
      %705 = vmatpush1.bf16.msra.mxu0 0
      %706 = vmatprep.subr.bf16.mxu0 0
      %707 = vmatpush1.bf16.msra.mxu0 %v659
      %708 = vmatprep.subr.bf16.mxu0 0
      %709 = vmatpush2.bf16.msra.mxu0 0
      %710 = vmatprep.subr.bf16.mxu0 0
      %711 = vmatpush2.bf16.msra.mxu0 0
      %712 = vmatprep.subr.bf16.mxu0 0
      %713 = vmatpush2.bf16.msra.mxu0 0
      %714 = vmatprep.subr.bf16.mxu0 0
      %715 = vmatpush2.bf16.msra.mxu0 0
      %716 = vmatprep.subr.bf16.mxu0 0
      %717 = vmatpush2.bf16.msra.mxu0 0
      %718 = vmatprep.subr.bf16.mxu0 0
      %719 = vmatpush2.bf16.msra.mxu0 0
      %720 = vmatprep.subr.bf16.mxu0 0
      %721 = vmatpush2.bf16.msra.mxu0 0
      %722 = vmatprep.subr.bf16.mxu0 0
      %723 = vmatpush2.bf16.msra.mxu0 0
      %724 = vmatprep.mubr.bf16.mxu0 0
      %725 = vmatmul.mubr.bf16.gmra.mxu0 %v663
      %v726 = vpop.f32.mrf.mxu0
      %v727 = vadd.f32 0.0, %v726
      %v728 = vpop.f32.mrf.mxu0
      %v729 = vpop.f32.mrf.mxu0
      %v730 = vadd.f32 0.0, %v729
      %v731 = vpop.f32.mrf.mxu0
      %732 = vmatprep.mubr.bf16.mxu0 0
      %733 = vmatmul.mubr.bf16.gmra.mxu0 %v666
      %v734 = vpop.f32.mrf.mxu0
      %v735 = vadd.f32 0.0, %v734
      %v736 = vpop.f32.mrf.mxu0
      %v737 = vpop.f32.mrf.mxu0
      %v738 = vadd.f32 0.0, %v737
      %v739 = vpop.f32.mrf.mxu0
      %740 = vmatprep.mubr.bf16.mxu0 0
      %741 = vmatmul.mubr.bf16.gmra.mxu0 %v669
      %v742 = vpop.f32.mrf.mxu0
      %v743 = vadd.f32 0.0, %v742
      %v744 = vpop.f32.mrf.mxu0
      %v745 = vpop.f32.mrf.mxu0
      %v746 = vadd.f32 0.0, %v745
      %v747 = vpop.f32.mrf.mxu0
      %748 = vmatprep.mubr.bf16.mxu0 0
      %749 = vmatmul.mubr.bf16.gmra.mxu0 %v672
      %v750 = vpop.f32.mrf.mxu0
      %v751 = vadd.f32 0.0, %v750
      %v752 = vpop.f32.mrf.mxu0
      %v753 = vpop.f32.mrf.mxu0
      %v754 = vadd.f32 0.0, %v753
      %v755 = vpop.f32.mrf.mxu0
      %756 = vmatprep.mubr.bf16.mxu0 0
      %757 = vmatmul.mubr.bf16.gmra.mxu0 %v675
      %v758 = vpop.f32.mrf.mxu0
      %v759 = vadd.f32 0.0, %v758
      %v760 = vpop.f32.mrf.mxu0
      %v761 = vpop.f32.mrf.mxu0
      %v762 = vadd.f32 0.0, %v761
      %v763 = vpop.f32.mrf.mxu0
      %764 = vmatprep.mubr.bf16.mxu0 0
      %765 = vmatmul.mubr.bf16.gmra.mxu0 %v678
      %v766 = vpop.f32.mrf.mxu0
      %v767 = vadd.f32 0.0, %v766
      %v768 = vpop.f32.mrf.mxu0
      %v769 = vpop.f32.mrf.mxu0
      %v770 = vadd.f32 0.0, %v769
      %v771 = vpop.f32.mrf.mxu0
      %772 = vmatprep.mubr.bf16.mxu0 0
      %773 = vmatmul.mubr.bf16.gmra.mxu0 %v681
      %v774 = vpop.f32.mrf.mxu0
      %v775 = vadd.f32 0.0, %v774
      %v776 = vpop.f32.mrf.mxu0
      %v777 = vpop.f32.mrf.mxu0
      %v778 = vadd.f32 0.0, %v777
      %v779 = vpop.f32.mrf.mxu0
      %780 = vmatprep.mubr.bf16.mxu0 0
      %781 = vmatmul.mubr.bf16.gmra.mxu0 %v684
      %v782 = vpop.f32.mrf.mxu0
      %v783 = vadd.f32 0.0, %v782
      %v784 = vpop.f32.mrf.mxu0
      %v785 = vpop.f32.mrf.mxu0
      %v786 = vadd.f32 0.0, %v785
      %v787 = vpop.f32.mrf.mxu0
      %788 = vmatprep.mubr.bf16.mxu0 0
      %789 = vmatmul.mubr.bf16.gmra.mxu0 %v687
      %v790 = vpop.f32.mrf.mxu0
      %v791 = vadd.f32 0.0, %v790
      %v792 = vpop.f32.mrf.mxu0
      %v793 = vpop.f32.mrf.mxu0
      %v794 = vadd.f32 0.0, %v793
      %v795 = vpop.f32.mrf.mxu0
      %796 = vmatprep.mubr.bf16.mxu0 0
      %797 = vmatmul.mubr.bf16.gmra.mxu0 %v690
      %v798 = vpop.f32.mrf.mxu0
      %v799 = vadd.f32 0.0, %v798
      %v800 = vpop.f32.mrf.mxu0
      %v801 = vpop.f32.mrf.mxu0
      %v802 = vadd.f32 0.0, %v801
      %v803 = vpop.f32.mrf.mxu0
      %804 = vdwg.mxu0
      %v805 = vld [vmem:[%s6] sm:$0x1]
      %v807 = vlaneseq
      %v808 = vshrl.u32 %v807, 7
      %v809 = vsub.s32 0, %v808
      %v810 = vrot.slane %v805, %v809
      %v812 = vmul.f32 %v727, %v810
      %v813 = vmul.f32 %v730, %v810
      %v814 = vmul.f32 %v735, %v810
      %v815 = vmul.f32 %v738, %v810
      %v816 = vmul.f32 %v743, %v810
      %v817 = vmul.f32 %v746, %v810
      %v818 = vmul.f32 %v751, %v810
      %v819 = vmul.f32 %v754, %v810
      %v820 = vmul.f32 %v759, %v810
      %v821 = vmul.f32 %v762, %v810
      %v822 = vmul.f32 %v767, %v810
      %v823 = vmul.f32 %v770, %v810
      %v824 = vmul.f32 %v775, %v810
      %v825 = vmul.f32 %v778, %v810
      %v826 = vmul.f32 %v783, %v810
      %v827 = vmul.f32 %v786, %v810
      %v828 = vmul.f32 %v791, %v810
      %v829 = vmul.f32 %v794, %v810
      %v830 = vmul.f32 %v799, %v810
      %v831 = vmul.f32 %v802, %v810
      %v832 = vld [vmem:[%s7] sm:$0x1]
      %v834 = vlaneseq
      %v835 = vshrl.u32 %v834, 7
      %v836 = vsub.s32 0, %v835
      %v837 = vrot.slane %v832, %v836
      %v839 = vadd.f32 %v812, %v837
      %v840 = vadd.f32 %v813, %v837
      %v841 = vadd.f32 %v814, %v837
      %v842 = vadd.f32 %v815, %v837
      %v843 = vadd.f32 %v816, %v837
      %v844 = vadd.f32 %v817, %v837
      %v845 = vadd.f32 %v818, %v837
      %v846 = vadd.f32 %v819, %v837
      %v847 = vadd.f32 %v820, %v837
      %v848 = vadd.f32 %v821, %v837
      %v849 = vadd.f32 %v822, %v837
      %v850 = vadd.f32 %v823, %v837
      %v851 = vadd.f32 %v824, %v837
      %v852 = vadd.f32 %v825, %v837
      %v853 = vadd.f32 %v826, %v837
      %v854 = vadd.f32 %v827, %v837
      %v855 = vadd.f32 %v828, %v837
      %v856 = vadd.f32 %v829, %v837
      %v857 = vadd.f32 %v830, %v837
      %v858 = vadd.f32 %v831, %v837
      %v859 = vmax.f32 %v839, 0.0
      %v860 = vmax.f32 %v840, 0.0
      %v861 = vmax.f32 %v841, 0.0
      %v862 = vmax.f32 %v842, 0.0
      %v863 = vmax.f32 %v843, 0.0
      %v864 = vmax.f32 %v844, 0.0
      %v865 = vmax.f32 %v845, 0.0
      %v866 = vmax.f32 %v846, 0.0
      %v867 = vmax.f32 %v847, 0.0
      %v868 = vmax.f32 %v848, 0.0
      %v869 = vmax.f32 %v849, 0.0
      %v870 = vmax.f32 %v850, 0.0
      %v871 = vmax.f32 %v851, 0.0
      %v872 = vmax.f32 %v852, 0.0
      %v873 = vmax.f32 %v853, 0.0
      %v874 = vmax.f32 %v854, 0.0
      %v875 = vmax.f32 %v855, 0.0
      %v876 = vmax.f32 %v856, 0.0
      %v877 = vmax.f32 %v857, 0.0
      %v878 = vmax.f32 %v858, 0.0
      %p879 = scmp.gt.s32.totalorder %s28, 0
      %s880 = scalar_select %p879, 1, 0
      %v881 = vstv %s880
      %vm882 = vcmp.eq.s32.totalorder %v881, 1
      %p883 = scmp.lt.s32.totalorder %s28, 1
      %s884 = scalar_select %p883, 1, 0
      %v885 = vstv %s884
      %vm886 = vcmp.eq.s32.totalorder %v885, 1
      %v887 = vsel %vm882, %v859, 0.0
      %v888 = vsel %vm882, %v860, 0.0
      %v889 = vsel 1, %v861, 0.0
      %v890 = vsel 1, %v862, 0.0
      %v891 = vsel 1, %v863, 0.0
      %v892 = vsel 1, %v864, 0.0
      %v893 = vsel 1, %v865, 0.0
      %v894 = vsel 1, %v866, 0.0
      %v895 = vsel 1, %v867, 0.0
      %v896 = vsel 1, %v868, 0.0
      %v897 = vsel 1, %v869, 0.0
      %v898 = vsel 1, %v870, 0.0
      %v899 = vsel 1, %v871, 0.0
      %v900 = vsel 1, %v872, 0.0
      %v901 = vsel 1, %v873, 0.0
      %v902 = vsel 1, %v874, 0.0
      %v903 = vsel 1, %v875, 0.0
      %v904 = vsel 1, %v876, 0.0
      %v905 = vsel %vm886, %v877, 0.0
      %v906 = vsel %vm886, %v878, 0.0
      %v907 = vpack.c.bf16 %v888, %v887
      %v908 = vpack.c.bf16 %v890, %v889
      %v909 = vpack.c.bf16 %v892, %v891
      %v910 = vpack.c.bf16 %v894, %v893
      %v911 = vpack.c.bf16 %v896, %v895
      %v912 = vpack.c.bf16 %v898, %v897
      %v913 = vpack.c.bf16 %v900, %v899
      %v914 = vpack.c.bf16 %v902, %v901
      %v915 = vpack.c.bf16 %v904, %v903
      %v916 = vpack.c.bf16 %v906, %v905
      %v918 = vshrl.u32 %v907, 16
      %v920 = vrot.slane %v918, 7
      %v921 = vshll.u32 %v907, 16
      %v923 = vor.u32 %v920, %v921
      %v925 = vshrl.u32 %v908, 16
      %v927 = vrot.slane %v925, 7
      %v928 = vshll.u32 %v908, 16
      %v930 = vor.u32 %v927, %v928
      %v932 = vshrl.u32 %v909, 16
      %v934 = vrot.slane %v932, 7
      %v935 = vshll.u32 %v909, 16
      %v937 = vor.u32 %v934, %v935
      %v939 = vshrl.u32 %v910, 16
      %v941 = vrot.slane %v939, 7
      %v942 = vshll.u32 %v910, 16
      %v944 = vor.u32 %v941, %v942
      %v946 = vshrl.u32 %v911, 16
      %v948 = vrot.slane %v946, 7
      %v949 = vshll.u32 %v911, 16
      %v951 = vor.u32 %v948, %v949
      %v953 = vshrl.u32 %v912, 16
      %v955 = vrot.slane %v953, 7
      %v956 = vshll.u32 %v912, 16
      %v958 = vor.u32 %v955, %v956
      %v960 = vshrl.u32 %v913, 16
      %v962 = vrot.slane %v960, 7
      %v963 = vshll.u32 %v913, 16
      %v965 = vor.u32 %v962, %v963
      %v967 = vshrl.u32 %v914, 16
      %v969 = vrot.slane %v967, 7
      %v970 = vshll.u32 %v914, 16
      %v972 = vor.u32 %v969, %v970
      %v974 = vshrl.u32 %v915, 16
      %v976 = vrot.slane %v974, 7
      %v977 = vshll.u32 %v915, 16
      %v979 = vor.u32 %v976, %v977
      %v981 = vshrl.u32 %v916, 16
      %v983 = vrot.slane %v981, 7
      %v984 = vshll.u32 %v916, 16
      %v986 = vor.u32 %v983, %v984
      %vm1007 = vcmask 1040384
      %vm1008 = vsmask.f32 256
      %vm1009 = vmand %vm1007, %vm1008
      %v1010 = vsel %vm1009, 0, %v923
      %v1011 = vsel %vm1009, 0, %v930
      %v1012 = vsel %vm1009, 0, %v937
      %v1013 = vsel %vm1009, 0, %v944
      %v1014 = vsel %vm1009, 0, %v951
      %v1015 = vsel %vm1009, 0, %v958
      %v1016 = vsel %vm1009, 0, %v965
      %v1017 = vsel %vm1009, 0, %v972
      %v1018 = vsel %vm1009, 0, %v979
      %v1019 = vsel %vm1009, 0, %v986
      %v1020 = vsel %vm1009, %v920, 0
      %v1021 = vsel %vm1009, %v927, 0
      %v1022 = vsel %vm1009, %v934, 0
      %v1023 = vsel %vm1009, %v941, 0
      %v1024 = vsel %vm1009, %v948, 0
      %v1025 = vsel %vm1009, %v955, 0
      %v1026 = vsel %vm1009, %v962, 0
      %v1027 = vsel %vm1009, %v969, 0
      %v1028 = vsel %vm1009, %v976, 0
      %v1029 = vsel %vm1009, %v983, 0
      %v1030 = vld [vmem:[%s4] sm:$0x3]
      %vm1031 = vsmask.f32 7424
      %v1033 = vshrl.u32 %v1010, 16
      %v1035 = vshll.u32 %v1010, 16
      %v1037 = vrot.slane %v1035, 1
      %v1038 = vor.u32 %v1033, %v1037
      %v1040 = vshll.u32 %v1020, 16
      %v1042 = vrot.slane %v1040, 1
      %v1043 = vsel %vm1031, %v1038, %v1042
      %v1045 = vshrl.u32 %v1011, 16
      %v1047 = vshll.u32 %v1011, 16
      %v1049 = vrot.slane %v1047, 1
      %v1050 = vor.u32 %v1045, %v1049
      %v1052 = vshll.u32 %v1021, 16
      %v1054 = vrot.slane %v1052, 1
      %v1055 = vsel %vm1031, %v1050, %v1054
      %v1057 = vshrl.u32 %v1012, 16
      %v1059 = vshll.u32 %v1012, 16
      %v1061 = vrot.slane %v1059, 1
      %v1062 = vor.u32 %v1057, %v1061
      %v1064 = vshll.u32 %v1022, 16
      %v1066 = vrot.slane %v1064, 1
      %v1067 = vsel %vm1031, %v1062, %v1066
      %v1069 = vshrl.u32 %v1013, 16
      %v1071 = vshll.u32 %v1013, 16
      %v1073 = vrot.slane %v1071, 1
      %v1074 = vor.u32 %v1069, %v1073
      %v1076 = vshll.u32 %v1023, 16
      %v1078 = vrot.slane %v1076, 1
      %v1079 = vsel %vm1031, %v1074, %v1078
      %v1081 = vshrl.u32 %v1014, 16
      %v1083 = vshll.u32 %v1014, 16
      %v1085 = vrot.slane %v1083, 1
      %v1086 = vor.u32 %v1081, %v1085
      %v1088 = vshll.u32 %v1024, 16
      %v1090 = vrot.slane %v1088, 1
      %v1091 = vsel %vm1031, %v1086, %v1090
      %v1093 = vshrl.u32 %v1015, 16
      %v1095 = vshll.u32 %v1015, 16
      %v1097 = vrot.slane %v1095, 1
      %v1098 = vor.u32 %v1093, %v1097
      %v1100 = vshll.u32 %v1025, 16
      %v1102 = vrot.slane %v1100, 1
      %v1103 = vsel %vm1031, %v1098, %v1102
      %v1105 = vshrl.u32 %v1016, 16
      %v1107 = vshll.u32 %v1016, 16
      %v1109 = vrot.slane %v1107, 1
      %v1110 = vor.u32 %v1105, %v1109
      %v1112 = vshll.u32 %v1026, 16
      %v1114 = vrot.slane %v1112, 1
      %v1115 = vsel %vm1031, %v1110, %v1114
      %v1117 = vshrl.u32 %v1017, 16
      %v1119 = vshll.u32 %v1017, 16
      %v1121 = vrot.slane %v1119, 1
      %v1122 = vor.u32 %v1117, %v1121
      %v1124 = vshll.u32 %v1027, 16
      %v1126 = vrot.slane %v1124, 1
      %v1127 = vsel %vm1031, %v1122, %v1126
      %s1128 = scalar_lea.vmem %s4, 2
      %v1129 = vld [vmem:[%s1128] sm:$0x3]
      %vm1130 = vcmask 31744
      %v1132 = vsel %vm1130, %v1043, 0
      %v1135 = vsel %vm1130, %v1055, 0
      %v1138 = vsel %vm1130, %v1067, 0
      %v1141 = vsel %vm1130, %v1079, 0
      %v1144 = vsel %vm1130, %v1091, 0
      %v1147 = vsel %vm1130, %v1103, 0
      %v1150 = vsel %vm1130, %v1115, 0
      %v1153 = vsel %vm1130, %v1127, 0
      %vm1155 = vcmask 1041408
      %v1157 = vsel %vm1155, %v1129, 0
      %1159 = vmatprep.subr.bf16.mxu0 0
      %1160 = vmatpush1.bf16.msra.mxu0 0
      %1161 = vmatprep.subr.bf16.mxu0 0
      %1162 = vmatpush1.bf16.msra.mxu0 0
      %1163 = vmatprep.subr.bf16.mxu0 0
      %1164 = vmatpush1.bf16.msra.mxu0 0
      %1165 = vmatprep.subr.bf16.mxu0 0
      %1166 = vmatpush1.bf16.msra.mxu0 0
      %1167 = vmatprep.subr.bf16.mxu0 0
      %1168 = vmatpush1.bf16.msra.mxu0 0
      %1169 = vmatprep.subr.bf16.mxu0 0
      %1170 = vmatpush1.bf16.msra.mxu0 0
      %1171 = vmatprep.subr.bf16.mxu0 0
      %1172 = vmatpush1.bf16.msra.mxu0 0
      %1173 = vmatprep.subr.bf16.mxu0 0
      %1174 = vmatpush1.bf16.msra.mxu0 %v1157
      %1175 = vmatprep.subr.bf16.mxu0 0
      %1176 = vmatpush2.bf16.msra.mxu0 0
      %1177 = vmatprep.subr.bf16.mxu0 0
      %1178 = vmatpush2.bf16.msra.mxu0 0
      %1179 = vmatprep.subr.bf16.mxu0 0
      %1180 = vmatpush2.bf16.msra.mxu0 0
      %1181 = vmatprep.subr.bf16.mxu0 0
      %1182 = vmatpush2.bf16.msra.mxu0 0
      %1183 = vmatprep.subr.bf16.mxu0 0
      %1184 = vmatpush2.bf16.msra.mxu0 0
      %1185 = vmatprep.subr.bf16.mxu0 0
      %1186 = vmatpush2.bf16.msra.mxu0 0
      %1187 = vmatprep.subr.bf16.mxu0 0
      %1188 = vmatpush2.bf16.msra.mxu0 0
      %1189 = vmatprep.subr.bf16.mxu0 0
      %1190 = vmatpush2.bf16.msra.mxu0 0
      %1191 = vmatprep.mubr.bf16.mxu0 0
      %1192 = vmatmul.mubr.bf16.gmra.mxu0 %v1132
      %v1193 = vpop.f32.mrf.mxu0
      %v1194 = vadd.f32 0.0, %v1193
      %v1195 = vpop.f32.mrf.mxu0
      %v1196 = vpop.f32.mrf.mxu0
      %v1197 = vadd.f32 0.0, %v1196
      %v1198 = vpop.f32.mrf.mxu0
      %1199 = vmatprep.mubr.bf16.mxu0 0
      %1200 = vmatmul.mubr.bf16.gmra.mxu0 %v1135
      %v1201 = vpop.f32.mrf.mxu0
      %v1202 = vadd.f32 0.0, %v1201
      %v1203 = vpop.f32.mrf.mxu0
      %v1204 = vpop.f32.mrf.mxu0
      %v1205 = vadd.f32 0.0, %v1204
      %v1206 = vpop.f32.mrf.mxu0
      %1207 = vmatprep.mubr.bf16.mxu0 0
      %1208 = vmatmul.mubr.bf16.gmra.mxu0 %v1138
      %v1209 = vpop.f32.mrf.mxu0
      %v1210 = vadd.f32 0.0, %v1209
      %v1211 = vpop.f32.mrf.mxu0
      %v1212 = vpop.f32.mrf.mxu0
      %v1213 = vadd.f32 0.0, %v1212
      %v1214 = vpop.f32.mrf.mxu0
      %1215 = vmatprep.mubr.bf16.mxu0 0
      %1216 = vmatmul.mubr.bf16.gmra.mxu0 %v1141
      %v1217 = vpop.f32.mrf.mxu0
      %v1218 = vadd.f32 0.0, %v1217
      %v1219 = vpop.f32.mrf.mxu0
      %v1220 = vpop.f32.mrf.mxu0
      %v1221 = vadd.f32 0.0, %v1220
      %v1222 = vpop.f32.mrf.mxu0
      %1223 = vmatprep.mubr.bf16.mxu0 0
      %1224 = vmatmul.mubr.bf16.gmra.mxu0 %v1144
      %v1225 = vpop.f32.mrf.mxu0
      %v1226 = vadd.f32 0.0, %v1225
      %v1227 = vpop.f32.mrf.mxu0
      %v1228 = vpop.f32.mrf.mxu0
      %v1229 = vadd.f32 0.0, %v1228
      %v1230 = vpop.f32.mrf.mxu0
      %1231 = vmatprep.mubr.bf16.mxu0 0
      %1232 = vmatmul.mubr.bf16.gmra.mxu0 %v1147
      %v1233 = vpop.f32.mrf.mxu0
      %v1234 = vadd.f32 0.0, %v1233
      %v1235 = vpop.f32.mrf.mxu0
      %v1236 = vpop.f32.mrf.mxu0
      %v1237 = vadd.f32 0.0, %v1236
      %v1238 = vpop.f32.mrf.mxu0
      %1239 = vmatprep.mubr.bf16.mxu0 0
      %1240 = vmatmul.mubr.bf16.gmra.mxu0 %v1150
      %v1241 = vpop.f32.mrf.mxu0
      %v1242 = vadd.f32 0.0, %v1241
      %v1243 = vpop.f32.mrf.mxu0
      %v1244 = vpop.f32.mrf.mxu0
      %v1245 = vadd.f32 0.0, %v1244
      %v1246 = vpop.f32.mrf.mxu0
      %1247 = vmatprep.mubr.bf16.mxu0 0
      %1248 = vmatmul.mubr.bf16.gmra.mxu0 %v1153
      %v1249 = vpop.f32.mrf.mxu0
      %v1250 = vadd.f32 0.0, %v1249
      %v1251 = vpop.f32.mrf.mxu0
      %v1252 = vpop.f32.mrf.mxu0
      %v1253 = vadd.f32 0.0, %v1252
      %v1254 = vpop.f32.mrf.mxu0
      %1255 = vdwg.mxu0
      %v1256 = vsel %vm1130, %v1010, 0
      %v1258 = vsel %vm1130, %v1011, 0
      %v1260 = vsel %vm1130, %v1012, 0
      %v1262 = vsel %vm1130, %v1013, 0
      %v1264 = vsel %vm1130, %v1014, 0
      %v1266 = vsel %vm1130, %v1015, 0
      %v1268 = vsel %vm1130, %v1016, 0
      %v1270 = vsel %vm1130, %v1017, 0
      %v1273 = vsel %vm1155, %v1030, 0
      %1275 = vmatprep.subr.bf16.mxu0 0
      %1276 = vmatpush1.bf16.msra.mxu0 0
      %1277 = vmatprep.subr.bf16.mxu0 0
      %1278 = vmatpush1.bf16.msra.mxu0 0
      %1279 = vmatprep.subr.bf16.mxu0 0
      %1280 = vmatpush1.bf16.msra.mxu0 0
      %1281 = vmatprep.subr.bf16.mxu0 0
      %1282 = vmatpush1.bf16.msra.mxu0 0
      %1283 = vmatprep.subr.bf16.mxu0 0
      %1284 = vmatpush1.bf16.msra.mxu0 0
      %1285 = vmatprep.subr.bf16.mxu0 0
      %1286 = vmatpush1.bf16.msra.mxu0 0
      %1287 = vmatprep.subr.bf16.mxu0 0
      %1288 = vmatpush1.bf16.msra.mxu0 0
      %1289 = vmatprep.subr.bf16.mxu0 0
      %1290 = vmatpush1.bf16.msra.mxu0 %v1273
      %1291 = vmatprep.subr.bf16.mxu0 0
      %1292 = vmatpush2.bf16.msra.mxu0 0
      %1293 = vmatprep.subr.bf16.mxu0 0
      %1294 = vmatpush2.bf16.msra.mxu0 0
      %1295 = vmatprep.subr.bf16.mxu0 0
      %1296 = vmatpush2.bf16.msra.mxu0 0
      %1297 = vmatprep.subr.bf16.mxu0 0
      %1298 = vmatpush2.bf16.msra.mxu0 0
      %1299 = vmatprep.subr.bf16.mxu0 0
      %1300 = vmatpush2.bf16.msra.mxu0 0
      %1301 = vmatprep.subr.bf16.mxu0 0
      %1302 = vmatpush2.bf16.msra.mxu0 0
      %1303 = vmatprep.subr.bf16.mxu0 0
      %1304 = vmatpush2.bf16.msra.mxu0 0
      %1305 = vmatprep.subr.bf16.mxu0 0
      %1306 = vmatpush2.bf16.msra.mxu0 0
      %1307 = vmatprep.mubr.bf16.mxu0 0
      %1308 = vmatmul.mubr.bf16.gmra.mxu0 %v1256
      %v1309 = vpop.f32.mrf.mxu0
      %v1310 = vadd.f32 %v1194, %v1309
      %v1311 = vpop.f32.mrf.mxu0
      %v1312 = vpop.f32.mrf.mxu0
      %v1313 = vadd.f32 %v1197, %v1312
      %v1314 = vpop.f32.mrf.mxu0
      %1315 = vmatprep.mubr.bf16.mxu0 0
      %1316 = vmatmul.mubr.bf16.gmra.mxu0 %v1258
      %v1317 = vpop.f32.mrf.mxu0
      %v1318 = vadd.f32 %v1202, %v1317
      %v1319 = vpop.f32.mrf.mxu0
      %v1320 = vpop.f32.mrf.mxu0
      %v1321 = vadd.f32 %v1205, %v1320
      %v1322 = vpop.f32.mrf.mxu0
      %1323 = vmatprep.mubr.bf16.mxu0 0
      %1324 = vmatmul.mubr.bf16.gmra.mxu0 %v1260
      %v1325 = vpop.f32.mrf.mxu0
      %v1326 = vadd.f32 %v1210, %v1325
      %v1327 = vpop.f32.mrf.mxu0
      %v1328 = vpop.f32.mrf.mxu0
      %v1329 = vadd.f32 %v1213, %v1328
      %v1330 = vpop.f32.mrf.mxu0
      %1331 = vmatprep.mubr.bf16.mxu0 0
      %1332 = vmatmul.mubr.bf16.gmra.mxu0 %v1262
      %v1333 = vpop.f32.mrf.mxu0
      %v1334 = vadd.f32 %v1218, %v1333
      %v1335 = vpop.f32.mrf.mxu0
      %v1336 = vpop.f32.mrf.mxu0
      %v1337 = vadd.f32 %v1221, %v1336
      %v1338 = vpop.f32.mrf.mxu0
      %1339 = vmatprep.mubr.bf16.mxu0 0
      %1340 = vmatmul.mubr.bf16.gmra.mxu0 %v1264
      %v1341 = vpop.f32.mrf.mxu0
      %v1342 = vadd.f32 %v1226, %v1341
      %v1343 = vpop.f32.mrf.mxu0
      %v1344 = vpop.f32.mrf.mxu0
      %v1345 = vadd.f32 %v1229, %v1344
      %v1346 = vpop.f32.mrf.mxu0
      %1347 = vmatprep.mubr.bf16.mxu0 0
      %1348 = vmatmul.mubr.bf16.gmra.mxu0 %v1266
      %v1349 = vpop.f32.mrf.mxu0
      %v1350 = vadd.f32 %v1234, %v1349
      %v1351 = vpop.f32.mrf.mxu0
      %v1352 = vpop.f32.mrf.mxu0
      %v1353 = vadd.f32 %v1237, %v1352
      %v1354 = vpop.f32.mrf.mxu0
      %1355 = vmatprep.mubr.bf16.mxu0 0
      %1356 = vmatmul.mubr.bf16.gmra.mxu0 %v1268
      %v1357 = vpop.f32.mrf.mxu0
      %v1358 = vadd.f32 %v1242, %v1357
      %v1359 = vpop.f32.mrf.mxu0
      %v1360 = vpop.f32.mrf.mxu0
      %v1361 = vadd.f32 %v1245, %v1360
      %v1362 = vpop.f32.mrf.mxu0
      %1363 = vmatprep.mubr.bf16.mxu0 0
      %1364 = vmatmul.mubr.bf16.gmra.mxu0 %v1270
      %v1365 = vpop.f32.mrf.mxu0
      %v1366 = vadd.f32 %v1250, %v1365
      %v1367 = vpop.f32.mrf.mxu0
      %v1368 = vpop.f32.mrf.mxu0
      %v1369 = vadd.f32 %v1253, %v1368
      %v1370 = vpop.f32.mrf.mxu0
      %1371 = vdwg.mxu0
      %vm1388 = vcmask 1046528
      %v1389 = vrot.slane %v1010, 1
      %v1390 = vrot.slane %v1020, 1
      %v1391 = vsel %vm1388, %v1389, %v1390
      %v1392 = vrot.slane %v1011, 1
      %v1393 = vrot.slane %v1021, 1
      %v1394 = vsel %vm1388, %v1392, %v1393
      %v1395 = vrot.slane %v1012, 1
      %v1396 = vrot.slane %v1022, 1
      %v1397 = vsel %vm1388, %v1395, %v1396
      %v1398 = vrot.slane %v1013, 1
      %v1399 = vrot.slane %v1023, 1
      %v1400 = vsel %vm1388, %v1398, %v1399
      %v1401 = vrot.slane %v1014, 1
      %v1402 = vrot.slane %v1024, 1
      %v1403 = vsel %vm1388, %v1401, %v1402
      %v1404 = vrot.slane %v1015, 1
      %v1405 = vrot.slane %v1025, 1
      %v1406 = vsel %vm1388, %v1404, %v1405
      %v1407 = vrot.slane %v1016, 1
      %v1408 = vrot.slane %v1026, 1
      %v1409 = vsel %vm1388, %v1407, %v1408
      %v1410 = vrot.slane %v1017, 1
      %v1411 = vrot.slane %v1027, 1
      %v1412 = vsel %vm1388, %v1410, %v1411
      %s1413 = scalar_lea.vmem %s4, 4
      %v1414 = vld [vmem:[%s1413] sm:$0x3]
      %v1416 = vsel %vm1130, %v1391, 0
      %v1419 = vsel %vm1130, %v1394, 0
      %v1422 = vsel %vm1130, %v1397, 0
      %v1425 = vsel %vm1130, %v1400, 0
      %v1428 = vsel %vm1130, %v1403, 0
      %v1431 = vsel %vm1130, %v1406, 0
      %v1434 = vsel %vm1130, %v1409, 0
      %v1437 = vsel %vm1130, %v1412, 0
      %v1440 = vsel %vm1155, %v1414, 0
      %1442 = vmatprep.subr.bf16.mxu0 0
      %1443 = vmatpush1.bf16.msra.mxu0 0
      %1444 = vmatprep.subr.bf16.mxu0 0
      %1445 = vmatpush1.bf16.msra.mxu0 0
      %1446 = vmatprep.subr.bf16.mxu0 0
      %1447 = vmatpush1.bf16.msra.mxu0 0
      %1448 = vmatprep.subr.bf16.mxu0 0
      %1449 = vmatpush1.bf16.msra.mxu0 0
      %1450 = vmatprep.subr.bf16.mxu0 0
      %1451 = vmatpush1.bf16.msra.mxu0 0
      %1452 = vmatprep.subr.bf16.mxu0 0
      %1453 = vmatpush1.bf16.msra.mxu0 0
      %1454 = vmatprep.subr.bf16.mxu0 0
      %1455 = vmatpush1.bf16.msra.mxu0 0
      %1456 = vmatprep.subr.bf16.mxu0 0
      %1457 = vmatpush1.bf16.msra.mxu0 %v1440
      %1458 = vmatprep.subr.bf16.mxu0 0
      %1459 = vmatpush2.bf16.msra.mxu0 0
      %1460 = vmatprep.subr.bf16.mxu0 0
      %1461 = vmatpush2.bf16.msra.mxu0 0
      %1462 = vmatprep.subr.bf16.mxu0 0
      %1463 = vmatpush2.bf16.msra.mxu0 0
      %1464 = vmatprep.subr.bf16.mxu0 0
      %1465 = vmatpush2.bf16.msra.mxu0 0
      %1466 = vmatprep.subr.bf16.mxu0 0
      %1467 = vmatpush2.bf16.msra.mxu0 0
      %1468 = vmatprep.subr.bf16.mxu0 0
      %1469 = vmatpush2.bf16.msra.mxu0 0
      %1470 = vmatprep.subr.bf16.mxu0 0
      %1471 = vmatpush2.bf16.msra.mxu0 0
      %1472 = vmatprep.subr.bf16.mxu0 0
      %1473 = vmatpush2.bf16.msra.mxu0 0
      %1474 = vmatprep.mubr.bf16.mxu0 0
      %1475 = vmatmul.mubr.bf16.gmra.mxu0 %v1416
      %v1476 = vpop.f32.mrf.mxu0
      %v1477 = vadd.f32 0.0, %v1476
      %v1478 = vpop.f32.mrf.mxu0
      %v1479 = vpop.f32.mrf.mxu0
      %v1480 = vadd.f32 0.0, %v1479
      %v1481 = vpop.f32.mrf.mxu0
      %1482 = vmatprep.mubr.bf16.mxu0 0
      %1483 = vmatmul.mubr.bf16.gmra.mxu0 %v1419
      %v1484 = vpop.f32.mrf.mxu0
      %v1485 = vadd.f32 0.0, %v1484
      %v1486 = vpop.f32.mrf.mxu0
      %v1487 = vpop.f32.mrf.mxu0
      %v1488 = vadd.f32 0.0, %v1487
      %v1489 = vpop.f32.mrf.mxu0
      %1490 = vmatprep.mubr.bf16.mxu0 0
      %1491 = vmatmul.mubr.bf16.gmra.mxu0 %v1422
      %v1492 = vpop.f32.mrf.mxu0
      %v1493 = vadd.f32 0.0, %v1492
      %v1494 = vpop.f32.mrf.mxu0
      %v1495 = vpop.f32.mrf.mxu0
      %v1496 = vadd.f32 0.0, %v1495
      %v1497 = vpop.f32.mrf.mxu0
      %1498 = vmatprep.mubr.bf16.mxu0 0
      %1499 = vmatmul.mubr.bf16.gmra.mxu0 %v1425
      %v1500 = vpop.f32.mrf.mxu0
      %v1501 = vadd.f32 0.0, %v1500
      %v1502 = vpop.f32.mrf.mxu0
      %v1503 = vpop.f32.mrf.mxu0
      %v1504 = vadd.f32 0.0, %v1503
      %v1505 = vpop.f32.mrf.mxu0
      %1506 = vmatprep.mubr.bf16.mxu0 0
      %1507 = vmatmul.mubr.bf16.gmra.mxu0 %v1428
      %v1508 = vpop.f32.mrf.mxu0
      %v1509 = vadd.f32 0.0, %v1508
      %v1510 = vpop.f32.mrf.mxu0
      %v1511 = vpop.f32.mrf.mxu0
      %v1512 = vadd.f32 0.0, %v1511
      %v1513 = vpop.f32.mrf.mxu0
      %1514 = vmatprep.mubr.bf16.mxu0 0
      %1515 = vmatmul.mubr.bf16.gmra.mxu0 %v1431
      %v1516 = vpop.f32.mrf.mxu0
      %v1517 = vadd.f32 0.0, %v1516
      %v1518 = vpop.f32.mrf.mxu0
      %v1519 = vpop.f32.mrf.mxu0
      %v1520 = vadd.f32 0.0, %v1519
      %v1521 = vpop.f32.mrf.mxu0
      %1522 = vmatprep.mubr.bf16.mxu0 0
      %1523 = vmatmul.mubr.bf16.gmra.mxu0 %v1434
      %v1524 = vpop.f32.mrf.mxu0
      %v1525 = vadd.f32 0.0, %v1524
      %v1526 = vpop.f32.mrf.mxu0
      %v1527 = vpop.f32.mrf.mxu0
      %v1528 = vadd.f32 0.0, %v1527
      %v1529 = vpop.f32.mrf.mxu0
      %1530 = vmatprep.mubr.bf16.mxu0 0
      %1531 = vmatmul.mubr.bf16.gmra.mxu0 %v1437
      %v1532 = vpop.f32.mrf.mxu0
      %v1533 = vadd.f32 0.0, %v1532
      %v1534 = vpop.f32.mrf.mxu0
      %v1535 = vpop.f32.mrf.mxu0
      %v1536 = vadd.f32 0.0, %v1535
      %v1537 = vpop.f32.mrf.mxu0
      %1538 = vdwg.mxu0
      %v1539 = vadd.f32 %v1310, %v1477
      %v1540 = vadd.f32 %v1313, %v1480
      %v1541 = vadd.f32 %v1318, %v1485
      %v1542 = vadd.f32 %v1321, %v1488
      %v1543 = vadd.f32 %v1326, %v1493
      %v1544 = vadd.f32 %v1329, %v1496
      %v1545 = vadd.f32 %v1334, %v1501
      %v1546 = vadd.f32 %v1337, %v1504
      %v1547 = vadd.f32 %v1342, %v1509
      %v1548 = vadd.f32 %v1345, %v1512
      %v1549 = vadd.f32 %v1350, %v1517
      %v1550 = vadd.f32 %v1353, %v1520
      %v1551 = vadd.f32 %v1358, %v1525
      %v1552 = vadd.f32 %v1361, %v1528
      %v1553 = vadd.f32 %v1366, %v1533
      %v1554 = vadd.f32 %v1369, %v1536
      %s1555 = scalar_lea.vmem %s4, 6
      %v1556 = vld [vmem:[%s1555] sm:$0x3]
      %v1558 = vsel %vm1130, %v1018, 0
      %v1561 = vsel %vm1155, %v1556, 0
      %1563 = vmatprep.subr.bf16.mxu0 0
      %1564 = vmatpush1.bf16.msra.mxu0 0
      %1565 = vmatprep.subr.bf16.mxu0 0
      %1566 = vmatpush1.bf16.msra.mxu0 0
      %1567 = vmatprep.subr.bf16.mxu0 0
      %1568 = vmatpush1.bf16.msra.mxu0 0
      %1569 = vmatprep.subr.bf16.mxu0 0
      %1570 = vmatpush1.bf16.msra.mxu0 0
      %1571 = vmatprep.subr.bf16.mxu0 0
      %1572 = vmatpush1.bf16.msra.mxu0 0
      %1573 = vmatprep.subr.bf16.mxu0 0
      %1574 = vmatpush1.bf16.msra.mxu0 0
      %1575 = vmatprep.subr.bf16.mxu0 0
      %1576 = vmatpush1.bf16.msra.mxu0 0
      %1577 = vmatprep.subr.bf16.mxu0 0
      %1578 = vmatpush1.bf16.msra.mxu0 %v1561
      %1579 = vmatprep.subr.bf16.mxu0 0
      %1580 = vmatpush2.bf16.msra.mxu0 0
      %1581 = vmatprep.subr.bf16.mxu0 0
      %1582 = vmatpush2.bf16.msra.mxu0 0
      %1583 = vmatprep.subr.bf16.mxu0 0
      %1584 = vmatpush2.bf16.msra.mxu0 0
      %1585 = vmatprep.subr.bf16.mxu0 0
      %1586 = vmatpush2.bf16.msra.mxu0 0
      %1587 = vmatprep.subr.bf16.mxu0 0
      %1588 = vmatpush2.bf16.msra.mxu0 0
      %1589 = vmatprep.subr.bf16.mxu0 0
      %1590 = vmatpush2.bf16.msra.mxu0 0
      %1591 = vmatprep.subr.bf16.mxu0 0
      %1592 = vmatpush2.bf16.msra.mxu0 0
      %1593 = vmatprep.subr.bf16.mxu0 0
      %1594 = vmatpush2.bf16.msra.mxu0 0
      %1595 = vmatprep.mubr.bf16.mxu0 0
      %1596 = vmatmul.mubr.bf16.gmra.mxu0 %v1258
      %v1597 = vpop.f32.mrf.mxu0
      %v1598 = vadd.f32 0.0, %v1597
      %v1599 = vpop.f32.mrf.mxu0
      %v1600 = vpop.f32.mrf.mxu0
      %v1601 = vadd.f32 0.0, %v1600
      %v1602 = vpop.f32.mrf.mxu0
      %1603 = vmatprep.mubr.bf16.mxu0 0
      %1604 = vmatmul.mubr.bf16.gmra.mxu0 %v1260
      %v1605 = vpop.f32.mrf.mxu0
      %v1606 = vadd.f32 0.0, %v1605
      %v1607 = vpop.f32.mrf.mxu0
      %v1608 = vpop.f32.mrf.mxu0
      %v1609 = vadd.f32 0.0, %v1608
      %v1610 = vpop.f32.mrf.mxu0
      %1611 = vmatprep.mubr.bf16.mxu0 0
      %1612 = vmatmul.mubr.bf16.gmra.mxu0 %v1262
      %v1613 = vpop.f32.mrf.mxu0
      %v1614 = vadd.f32 0.0, %v1613
      %v1615 = vpop.f32.mrf.mxu0
      %v1616 = vpop.f32.mrf.mxu0
      %v1617 = vadd.f32 0.0, %v1616
      %v1618 = vpop.f32.mrf.mxu0
      %1619 = vmatprep.mubr.bf16.mxu0 0
      %1620 = vmatmul.mubr.bf16.gmra.mxu0 %v1264
      %v1621 = vpop.f32.mrf.mxu0
      %v1622 = vadd.f32 0.0, %v1621
      %v1623 = vpop.f32.mrf.mxu0
      %v1624 = vpop.f32.mrf.mxu0
      %v1625 = vadd.f32 0.0, %v1624
      %v1626 = vpop.f32.mrf.mxu0
      %1627 = vmatprep.mubr.bf16.mxu0 0
      %1628 = vmatmul.mubr.bf16.gmra.mxu0 %v1266
      %v1629 = vpop.f32.mrf.mxu0
      %v1630 = vadd.f32 0.0, %v1629
      %v1631 = vpop.f32.mrf.mxu0
      %v1632 = vpop.f32.mrf.mxu0
      %v1633 = vadd.f32 0.0, %v1632
      %v1634 = vpop.f32.mrf.mxu0
      %1635 = vmatprep.mubr.bf16.mxu0 0
      %1636 = vmatmul.mubr.bf16.gmra.mxu0 %v1268
      %v1637 = vpop.f32.mrf.mxu0
      %v1638 = vadd.f32 0.0, %v1637
      %v1639 = vpop.f32.mrf.mxu0
      %v1640 = vpop.f32.mrf.mxu0
      %v1641 = vadd.f32 0.0, %v1640
      %v1642 = vpop.f32.mrf.mxu0
      %1643 = vmatprep.mubr.bf16.mxu0 0
      %1644 = vmatmul.mubr.bf16.gmra.mxu0 %v1270
      %v1645 = vpop.f32.mrf.mxu0
      %v1646 = vadd.f32 0.0, %v1645
      %v1647 = vpop.f32.mrf.mxu0
      %v1648 = vpop.f32.mrf.mxu0
      %v1649 = vadd.f32 0.0, %v1648
      %v1650 = vpop.f32.mrf.mxu0
      %1651 = vmatprep.mubr.bf16.mxu0 0
      %1652 = vmatmul.mubr.bf16.gmra.mxu0 %v1558
      %v1653 = vpop.f32.mrf.mxu0
      %v1654 = vadd.f32 0.0, %v1653
      %v1655 = vpop.f32.mrf.mxu0
      %v1656 = vpop.f32.mrf.mxu0
      %v1657 = vadd.f32 0.0, %v1656
      %v1658 = vpop.f32.mrf.mxu0
      %1659 = vdwg.mxu0
      %v1660 = vadd.f32 %v1539, %v1598
      %v1661 = vadd.f32 %v1540, %v1601
      %v1662 = vadd.f32 %v1541, %v1606
      %v1663 = vadd.f32 %v1542, %v1609
      %v1664 = vadd.f32 %v1543, %v1614
      %v1665 = vadd.f32 %v1544, %v1617
      %v1666 = vadd.f32 %v1545, %v1622
      %v1667 = vadd.f32 %v1546, %v1625
      %v1668 = vadd.f32 %v1547, %v1630
      %v1669 = vadd.f32 %v1548, %v1633
      %v1670 = vadd.f32 %v1549, %v1638
      %v1671 = vadd.f32 %v1550, %v1641
      %v1672 = vadd.f32 %v1551, %v1646
      %v1673 = vadd.f32 %v1552, %v1649
      %v1674 = vadd.f32 %v1553, %v1654
      %v1675 = vadd.f32 %v1554, %v1657
      %v1676 = vshrl.u32 %v1018, 16
      %v1678 = vshll.u32 %v1018, 16
      %v1680 = vrot.slane %v1678, 1
      %v1681 = vor.u32 %v1676, %v1680
      %v1683 = vshll.u32 %v1028, 16
      %v1685 = vrot.slane %v1683, 1
      %v1686 = vsel %vm1031, %v1681, %v1685
      %s1687 = scalar_lea.vmem %s4, 8
      %v1688 = vld [vmem:[%s1687] sm:$0x3]
      %v1690 = vsel %vm1130, %v1686, 0
      %v1693 = vsel %vm1155, %v1688, 0
      %1695 = vmatprep.subr.bf16.mxu0 0
      %1696 = vmatpush1.bf16.msra.mxu0 0
      %1697 = vmatprep.subr.bf16.mxu0 0
      %1698 = vmatpush1.bf16.msra.mxu0 0
      %1699 = vmatprep.subr.bf16.mxu0 0
      %1700 = vmatpush1.bf16.msra.mxu0 0
      %1701 = vmatprep.subr.bf16.mxu0 0
      %1702 = vmatpush1.bf16.msra.mxu0 0
      %1703 = vmatprep.subr.bf16.mxu0 0
      %1704 = vmatpush1.bf16.msra.mxu0 0
      %1705 = vmatprep.subr.bf16.mxu0 0
      %1706 = vmatpush1.bf16.msra.mxu0 0
      %1707 = vmatprep.subr.bf16.mxu0 0
      %1708 = vmatpush1.bf16.msra.mxu0 0
      %1709 = vmatprep.subr.bf16.mxu0 0
      %1710 = vmatpush1.bf16.msra.mxu0 %v1693
      %1711 = vmatprep.subr.bf16.mxu0 0
      %1712 = vmatpush2.bf16.msra.mxu0 0
      %1713 = vmatprep.subr.bf16.mxu0 0
      %1714 = vmatpush2.bf16.msra.mxu0 0
      %1715 = vmatprep.subr.bf16.mxu0 0
      %1716 = vmatpush2.bf16.msra.mxu0 0
      %1717 = vmatprep.subr.bf16.mxu0 0
      %1718 = vmatpush2.bf16.msra.mxu0 0
      %1719 = vmatprep.subr.bf16.mxu0 0
      %1720 = vmatpush2.bf16.msra.mxu0 0
      %1721 = vmatprep.subr.bf16.mxu0 0
      %1722 = vmatpush2.bf16.msra.mxu0 0
      %1723 = vmatprep.subr.bf16.mxu0 0
      %1724 = vmatpush2.bf16.msra.mxu0 0
      %1725 = vmatprep.subr.bf16.mxu0 0
      %1726 = vmatpush2.bf16.msra.mxu0 0
      %1727 = vmatprep.mubr.bf16.mxu0 0
      %1728 = vmatmul.mubr.bf16.gmra.mxu0 %v1135
      %v1729 = vpop.f32.mrf.mxu0
      %v1730 = vadd.f32 0.0, %v1729
      %v1731 = vpop.f32.mrf.mxu0
      %v1732 = vpop.f32.mrf.mxu0
      %v1733 = vadd.f32 0.0, %v1732
      %v1734 = vpop.f32.mrf.mxu0
      %1735 = vmatprep.mubr.bf16.mxu0 0
      %1736 = vmatmul.mubr.bf16.gmra.mxu0 %v1138
      %v1737 = vpop.f32.mrf.mxu0
      %v1738 = vadd.f32 0.0, %v1737
      %v1739 = vpop.f32.mrf.mxu0
      %v1740 = vpop.f32.mrf.mxu0
      %v1741 = vadd.f32 0.0, %v1740
      %v1742 = vpop.f32.mrf.mxu0
      %1743 = vmatprep.mubr.bf16.mxu0 0
      %1744 = vmatmul.mubr.bf16.gmra.mxu0 %v1141
      %v1745 = vpop.f32.mrf.mxu0
      %v1746 = vadd.f32 0.0, %v1745
      %v1747 = vpop.f32.mrf.mxu0
      %v1748 = vpop.f32.mrf.mxu0
      %v1749 = vadd.f32 0.0, %v1748
      %v1750 = vpop.f32.mrf.mxu0
      %1751 = vmatprep.mubr.bf16.mxu0 0
      %1752 = vmatmul.mubr.bf16.gmra.mxu0 %v1144
      %v1753 = vpop.f32.mrf.mxu0
      %v1754 = vadd.f32 0.0, %v1753
      %v1755 = vpop.f32.mrf.mxu0
      %v1756 = vpop.f32.mrf.mxu0
      %v1757 = vadd.f32 0.0, %v1756
      %v1758 = vpop.f32.mrf.mxu0
      %1759 = vmatprep.mubr.bf16.mxu0 0
      %1760 = vmatmul.mubr.bf16.gmra.mxu0 %v1147
      %v1761 = vpop.f32.mrf.mxu0
      %v1762 = vadd.f32 0.0, %v1761
      %v1763 = vpop.f32.mrf.mxu0
      %v1764 = vpop.f32.mrf.mxu0
      %v1765 = vadd.f32 0.0, %v1764
      %v1766 = vpop.f32.mrf.mxu0
      %1767 = vmatprep.mubr.bf16.mxu0 0
      %1768 = vmatmul.mubr.bf16.gmra.mxu0 %v1150
      %v1769 = vpop.f32.mrf.mxu0
      %v1770 = vadd.f32 0.0, %v1769
      %v1771 = vpop.f32.mrf.mxu0
      %v1772 = vpop.f32.mrf.mxu0
      %v1773 = vadd.f32 0.0, %v1772
      %v1774 = vpop.f32.mrf.mxu0
      %1775 = vmatprep.mubr.bf16.mxu0 0
      %1776 = vmatmul.mubr.bf16.gmra.mxu0 %v1153
      %v1777 = vpop.f32.mrf.mxu0
      %v1778 = vadd.f32 0.0, %v1777
      %v1779 = vpop.f32.mrf.mxu0
      %v1780 = vpop.f32.mrf.mxu0
      %v1781 = vadd.f32 0.0, %v1780
      %v1782 = vpop.f32.mrf.mxu0
      %1783 = vmatprep.mubr.bf16.mxu0 0
      %1784 = vmatmul.mubr.bf16.gmra.mxu0 %v1690
      %v1785 = vpop.f32.mrf.mxu0
      %v1786 = vadd.f32 0.0, %v1785
      %v1787 = vpop.f32.mrf.mxu0
      %v1788 = vpop.f32.mrf.mxu0
      %v1789 = vadd.f32 0.0, %v1788
      %v1790 = vpop.f32.mrf.mxu0
      %1791 = vdwg.mxu0
      %v1792 = vadd.f32 %v1660, %v1730
      %v1793 = vadd.f32 %v1661, %v1733
      %v1794 = vadd.f32 %v1662, %v1738
      %v1795 = vadd.f32 %v1663, %v1741
      %v1796 = vadd.f32 %v1664, %v1746
      %v1797 = vadd.f32 %v1665, %v1749
      %v1798 = vadd.f32 %v1666, %v1754
      %v1799 = vadd.f32 %v1667, %v1757
      %v1800 = vadd.f32 %v1668, %v1762
      %v1801 = vadd.f32 %v1669, %v1765
      %v1802 = vadd.f32 %v1670, %v1770
      %v1803 = vadd.f32 %v1671, %v1773
      %v1804 = vadd.f32 %v1672, %v1778
      %v1805 = vadd.f32 %v1673, %v1781
      %v1806 = vadd.f32 %v1674, %v1786
      %v1807 = vadd.f32 %v1675, %v1789
      %v1810 = vrot.slane %v1018, 1
      %v1811 = vrot.slane %v1028, 1
      %v1812 = vsel %vm1388, %v1810, %v1811
      %s1813 = scalar_lea.vmem %s4, 10
      %v1814 = vld [vmem:[%s1813] sm:$0x3]
      %v1816 = vsel %vm1130, %v1812, 0
      %v1819 = vsel %vm1155, %v1814, 0
      %1821 = vmatprep.subr.bf16.mxu0 0
      %1822 = vmatpush1.bf16.msra.mxu0 0
      %1823 = vmatprep.subr.bf16.mxu0 0
      %1824 = vmatpush1.bf16.msra.mxu0 0
      %1825 = vmatprep.subr.bf16.mxu0 0
      %1826 = vmatpush1.bf16.msra.mxu0 0
      %1827 = vmatprep.subr.bf16.mxu0 0
      %1828 = vmatpush1.bf16.msra.mxu0 0
      %1829 = vmatprep.subr.bf16.mxu0 0
      %1830 = vmatpush1.bf16.msra.mxu0 0
      %1831 = vmatprep.subr.bf16.mxu0 0
      %1832 = vmatpush1.bf16.msra.mxu0 0
      %1833 = vmatprep.subr.bf16.mxu0 0
      %1834 = vmatpush1.bf16.msra.mxu0 0
      %1835 = vmatprep.subr.bf16.mxu0 0
      %1836 = vmatpush1.bf16.msra.mxu0 %v1819
      %1837 = vmatprep.subr.bf16.mxu0 0
      %1838 = vmatpush2.bf16.msra.mxu0 0
      %1839 = vmatprep.subr.bf16.mxu0 0
      %1840 = vmatpush2.bf16.msra.mxu0 0
      %1841 = vmatprep.subr.bf16.mxu0 0
      %1842 = vmatpush2.bf16.msra.mxu0 0
      %1843 = vmatprep.subr.bf16.mxu0 0
      %1844 = vmatpush2.bf16.msra.mxu0 0
      %1845 = vmatprep.subr.bf16.mxu0 0
      %1846 = vmatpush2.bf16.msra.mxu0 0
      %1847 = vmatprep.subr.bf16.mxu0 0
      %1848 = vmatpush2.bf16.msra.mxu0 0
      %1849 = vmatprep.subr.bf16.mxu0 0
      %1850 = vmatpush2.bf16.msra.mxu0 0
      %1851 = vmatprep.subr.bf16.mxu0 0
      %1852 = vmatpush2.bf16.msra.mxu0 0
      %1853 = vmatprep.mubr.bf16.mxu0 0
      %1854 = vmatmul.mubr.bf16.gmra.mxu0 %v1419
      %v1855 = vpop.f32.mrf.mxu0
      %v1856 = vadd.f32 0.0, %v1855
      %v1857 = vpop.f32.mrf.mxu0
      %v1858 = vpop.f32.mrf.mxu0
      %v1859 = vadd.f32 0.0, %v1858
      %v1860 = vpop.f32.mrf.mxu0
      %1861 = vmatprep.mubr.bf16.mxu0 0
      %1862 = vmatmul.mubr.bf16.gmra.mxu0 %v1422
      %v1863 = vpop.f32.mrf.mxu0
      %v1864 = vadd.f32 0.0, %v1863
      %v1865 = vpop.f32.mrf.mxu0
      %v1866 = vpop.f32.mrf.mxu0
      %v1867 = vadd.f32 0.0, %v1866
      %v1868 = vpop.f32.mrf.mxu0
      %1869 = vmatprep.mubr.bf16.mxu0 0
      %1870 = vmatmul.mubr.bf16.gmra.mxu0 %v1425
      %v1871 = vpop.f32.mrf.mxu0
      %v1872 = vadd.f32 0.0, %v1871
      %v1873 = vpop.f32.mrf.mxu0
      %v1874 = vpop.f32.mrf.mxu0
      %v1875 = vadd.f32 0.0, %v1874
      %v1876 = vpop.f32.mrf.mxu0
      %1877 = vmatprep.mubr.bf16.mxu0 0
      %1878 = vmatmul.mubr.bf16.gmra.mxu0 %v1428
      %v1879 = vpop.f32.mrf.mxu0
      %v1880 = vadd.f32 0.0, %v1879
      %v1881 = vpop.f32.mrf.mxu0
      %v1882 = vpop.f32.mrf.mxu0
      %v1883 = vadd.f32 0.0, %v1882
      %v1884 = vpop.f32.mrf.mxu0
      %1885 = vmatprep.mubr.bf16.mxu0 0
      %1886 = vmatmul.mubr.bf16.gmra.mxu0 %v1431
      %v1887 = vpop.f32.mrf.mxu0
      %v1888 = vadd.f32 0.0, %v1887
      %v1889 = vpop.f32.mrf.mxu0
      %v1890 = vpop.f32.mrf.mxu0
      %v1891 = vadd.f32 0.0, %v1890
      %v1892 = vpop.f32.mrf.mxu0
      %1893 = vmatprep.mubr.bf16.mxu0 0
      %1894 = vmatmul.mubr.bf16.gmra.mxu0 %v1434
      %v1895 = vpop.f32.mrf.mxu0
      %v1896 = vadd.f32 0.0, %v1895
      %v1897 = vpop.f32.mrf.mxu0
      %v1898 = vpop.f32.mrf.mxu0
      %v1899 = vadd.f32 0.0, %v1898
      %v1900 = vpop.f32.mrf.mxu0
      %1901 = vmatprep.mubr.bf16.mxu0 0
      %1902 = vmatmul.mubr.bf16.gmra.mxu0 %v1437
      %v1903 = vpop.f32.mrf.mxu0
      %v1904 = vadd.f32 0.0, %v1903
      %v1905 = vpop.f32.mrf.mxu0
      %v1906 = vpop.f32.mrf.mxu0
      %v1907 = vadd.f32 0.0, %v1906
      %v1908 = vpop.f32.mrf.mxu0
      %1909 = vmatprep.mubr.bf16.mxu0 0
      %1910 = vmatmul.mubr.bf16.gmra.mxu0 %v1816
      %v1911 = vpop.f32.mrf.mxu0
      %v1912 = vadd.f32 0.0, %v1911
      %v1913 = vpop.f32.mrf.mxu0
      %v1914 = vpop.f32.mrf.mxu0
      %v1915 = vadd.f32 0.0, %v1914
      %v1916 = vpop.f32.mrf.mxu0
      %1917 = vdwg.mxu0
      %v1918 = vadd.f32 %v1792, %v1856
      %v1919 = vadd.f32 %v1793, %v1859
      %v1920 = vadd.f32 %v1794, %v1864
      %v1921 = vadd.f32 %v1795, %v1867
      %v1922 = vadd.f32 %v1796, %v1872
      %v1923 = vadd.f32 %v1797, %v1875
      %v1924 = vadd.f32 %v1798, %v1880
      %v1925 = vadd.f32 %v1799, %v1883
      %v1926 = vadd.f32 %v1800, %v1888
      %v1927 = vadd.f32 %v1801, %v1891
      %v1928 = vadd.f32 %v1802, %v1896
      %v1929 = vadd.f32 %v1803, %v1899
      %v1930 = vadd.f32 %v1804, %v1904
      %v1931 = vadd.f32 %v1805, %v1907
      %v1932 = vadd.f32 %v1806, %v1912
      %v1933 = vadd.f32 %v1807, %v1915
      %s1934 = scalar_lea.vmem %s4, 12
      %v1935 = vld [vmem:[%s1934] sm:$0x3]
      %v1937 = vsel %vm1130, %v1019, 0
      %v1940 = vsel %vm1155, %v1935, 0
      %1942 = vmatprep.subr.bf16.mxu0 0
      %1943 = vmatpush1.bf16.msra.mxu0 0
      %1944 = vmatprep.subr.bf16.mxu0 0
      %1945 = vmatpush1.bf16.msra.mxu0 0
      %1946 = vmatprep.subr.bf16.mxu0 0
      %1947 = vmatpush1.bf16.msra.mxu0 0
      %1948 = vmatprep.subr.bf16.mxu0 0
      %1949 = vmatpush1.bf16.msra.mxu0 0
      %1950 = vmatprep.subr.bf16.mxu0 0
      %1951 = vmatpush1.bf16.msra.mxu0 0
      %1952 = vmatprep.subr.bf16.mxu0 0
      %1953 = vmatpush1.bf16.msra.mxu0 0
      %1954 = vmatprep.subr.bf16.mxu0 0
      %1955 = vmatpush1.bf16.msra.mxu0 0
      %1956 = vmatprep.subr.bf16.mxu0 0
      %1957 = vmatpush1.bf16.msra.mxu0 %v1940
      %1958 = vmatprep.subr.bf16.mxu0 0
      %1959 = vmatpush2.bf16.msra.mxu0 0
      %1960 = vmatprep.subr.bf16.mxu0 0
      %1961 = vmatpush2.bf16.msra.mxu0 0
      %1962 = vmatprep.subr.bf16.mxu0 0
      %1963 = vmatpush2.bf16.msra.mxu0 0
      %1964 = vmatprep.subr.bf16.mxu0 0
      %1965 = vmatpush2.bf16.msra.mxu0 0
      %1966 = vmatprep.subr.bf16.mxu0 0
      %1967 = vmatpush2.bf16.msra.mxu0 0
      %1968 = vmatprep.subr.bf16.mxu0 0
      %1969 = vmatpush2.bf16.msra.mxu0 0
      %1970 = vmatprep.subr.bf16.mxu0 0
      %1971 = vmatpush2.bf16.msra.mxu0 0
      %1972 = vmatprep.subr.bf16.mxu0 0
      %1973 = vmatpush2.bf16.msra.mxu0 0
      %1974 = vmatprep.mubr.bf16.mxu0 0
      %1975 = vmatmul.mubr.bf16.gmra.mxu0 %v1260
      %v1976 = vpop.f32.mrf.mxu0
      %v1977 = vadd.f32 0.0, %v1976
      %v1978 = vpop.f32.mrf.mxu0
      %v1979 = vpop.f32.mrf.mxu0
      %v1980 = vadd.f32 0.0, %v1979
      %v1981 = vpop.f32.mrf.mxu0
      %1982 = vmatprep.mubr.bf16.mxu0 0
      %1983 = vmatmul.mubr.bf16.gmra.mxu0 %v1262
      %v1984 = vpop.f32.mrf.mxu0
      %v1985 = vadd.f32 0.0, %v1984
      %v1986 = vpop.f32.mrf.mxu0
      %v1987 = vpop.f32.mrf.mxu0
      %v1988 = vadd.f32 0.0, %v1987
      %v1989 = vpop.f32.mrf.mxu0
      %1990 = vmatprep.mubr.bf16.mxu0 0
      %1991 = vmatmul.mubr.bf16.gmra.mxu0 %v1264
      %v1992 = vpop.f32.mrf.mxu0
      %v1993 = vadd.f32 0.0, %v1992
      %v1994 = vpop.f32.mrf.mxu0
      %v1995 = vpop.f32.mrf.mxu0
      %v1996 = vadd.f32 0.0, %v1995
      %v1997 = vpop.f32.mrf.mxu0
      %1998 = vmatprep.mubr.bf16.mxu0 0
      %1999 = vmatmul.mubr.bf16.gmra.mxu0 %v1266
      %v2000 = vpop.f32.mrf.mxu0
      %v2001 = vadd.f32 0.0, %v2000
      %v2002 = vpop.f32.mrf.mxu0
      %v2003 = vpop.f32.mrf.mxu0
      %v2004 = vadd.f32 0.0, %v2003
      %v2005 = vpop.f32.mrf.mxu0
      %2006 = vmatprep.mubr.bf16.mxu0 0
      %2007 = vmatmul.mubr.bf16.gmra.mxu0 %v1268
      %v2008 = vpop.f32.mrf.mxu0
      %v2009 = vadd.f32 0.0, %v2008
      %v2010 = vpop.f32.mrf.mxu0
      %v2011 = vpop.f32.mrf.mxu0
      %v2012 = vadd.f32 0.0, %v2011
      %v2013 = vpop.f32.mrf.mxu0
      %2014 = vmatprep.mubr.bf16.mxu0 0
      %2015 = vmatmul.mubr.bf16.gmra.mxu0 %v1270
      %v2016 = vpop.f32.mrf.mxu0
      %v2017 = vadd.f32 0.0, %v2016
      %v2018 = vpop.f32.mrf.mxu0
      %v2019 = vpop.f32.mrf.mxu0
      %v2020 = vadd.f32 0.0, %v2019
      %v2021 = vpop.f32.mrf.mxu0
      %2022 = vmatprep.mubr.bf16.mxu0 0
      %2023 = vmatmul.mubr.bf16.gmra.mxu0 %v1558
      %v2024 = vpop.f32.mrf.mxu0
      %v2025 = vadd.f32 0.0, %v2024
      %v2026 = vpop.f32.mrf.mxu0
      %v2027 = vpop.f32.mrf.mxu0
      %v2028 = vadd.f32 0.0, %v2027
      %v2029 = vpop.f32.mrf.mxu0
      %2030 = vmatprep.mubr.bf16.mxu0 0
      %2031 = vmatmul.mubr.bf16.gmra.mxu0 %v1937
      %v2032 = vpop.f32.mrf.mxu0
      %v2033 = vadd.f32 0.0, %v2032
      %v2034 = vpop.f32.mrf.mxu0
      %v2035 = vpop.f32.mrf.mxu0
      %v2036 = vadd.f32 0.0, %v2035
      %v2037 = vpop.f32.mrf.mxu0
      %2038 = vdwg.mxu0
      %v2039 = vadd.f32 %v1918, %v1977
      %v2040 = vadd.f32 %v1919, %v1980
      %v2041 = vadd.f32 %v1920, %v1985
      %v2042 = vadd.f32 %v1921, %v1988
      %v2043 = vadd.f32 %v1922, %v1993
      %v2044 = vadd.f32 %v1923, %v1996
      %v2045 = vadd.f32 %v1924, %v2001
      %v2046 = vadd.f32 %v1925, %v2004
      %v2047 = vadd.f32 %v1926, %v2009
      %v2048 = vadd.f32 %v1927, %v2012
      %v2049 = vadd.f32 %v1928, %v2017
      %v2050 = vadd.f32 %v1929, %v2020
      %v2051 = vadd.f32 %v1930, %v2025
      %v2052 = vadd.f32 %v1931, %v2028
      %v2053 = vadd.f32 %v1932, %v2033
      %v2054 = vadd.f32 %v1933, %v2036
      %v2055 = vshrl.u32 %v1019, 16
      %v2057 = vshll.u32 %v1019, 16
      %v2059 = vrot.slane %v2057, 1
      %v2060 = vor.u32 %v2055, %v2059
      %v2062 = vshll.u32 %v1029, 16
      %v2064 = vrot.slane %v2062, 1
      %v2065 = vsel %vm1031, %v2060, %v2064
      %s2066 = scalar_lea.vmem %s4, 14
      %v2067 = vld [vmem:[%s2066] sm:$0x3]
      %v2069 = vsel %vm1130, %v2065, 0
      %v2072 = vsel %vm1155, %v2067, 0
      %2074 = vmatprep.subr.bf16.mxu0 0
      %2075 = vmatpush1.bf16.msra.mxu0 0
      %2076 = vmatprep.subr.bf16.mxu0 0
      %2077 = vmatpush1.bf16.msra.mxu0 0
      %2078 = vmatprep.subr.bf16.mxu0 0
      %2079 = vmatpush1.bf16.msra.mxu0 0
      %2080 = vmatprep.subr.bf16.mxu0 0
      %2081 = vmatpush1.bf16.msra.mxu0 0
      %2082 = vmatprep.subr.bf16.mxu0 0
      %2083 = vmatpush1.bf16.msra.mxu0 0
      %2084 = vmatprep.subr.bf16.mxu0 0
      %2085 = vmatpush1.bf16.msra.mxu0 0
      %2086 = vmatprep.subr.bf16.mxu0 0
      %2087 = vmatpush1.bf16.msra.mxu0 0
      %2088 = vmatprep.subr.bf16.mxu0 0
      %2089 = vmatpush1.bf16.msra.mxu0 %v2072
      %2090 = vmatprep.subr.bf16.mxu0 0
      %2091 = vmatpush2.bf16.msra.mxu0 0
      %2092 = vmatprep.subr.bf16.mxu0 0
      %2093 = vmatpush2.bf16.msra.mxu0 0
      %2094 = vmatprep.subr.bf16.mxu0 0
      %2095 = vmatpush2.bf16.msra.mxu0 0
      %2096 = vmatprep.subr.bf16.mxu0 0
      %2097 = vmatpush2.bf16.msra.mxu0 0
      %2098 = vmatprep.subr.bf16.mxu0 0
      %2099 = vmatpush2.bf16.msra.mxu0 0
      %2100 = vmatprep.subr.bf16.mxu0 0
      %2101 = vmatpush2.bf16.msra.mxu0 0
      %2102 = vmatprep.subr.bf16.mxu0 0
      %2103 = vmatpush2.bf16.msra.mxu0 0
      %2104 = vmatprep.subr.bf16.mxu0 0
      %2105 = vmatpush2.bf16.msra.mxu0 0
      %2106 = vmatprep.mubr.bf16.mxu0 0
      %2107 = vmatmul.mubr.bf16.gmra.mxu0 %v1138
      %v2108 = vpop.f32.mrf.mxu0
      %v2109 = vadd.f32 0.0, %v2108
      %v2110 = vpop.f32.mrf.mxu0
      %v2111 = vpop.f32.mrf.mxu0
      %v2112 = vadd.f32 0.0, %v2111
      %v2113 = vpop.f32.mrf.mxu0
      %2114 = vmatprep.mubr.bf16.mxu0 0
      %2115 = vmatmul.mubr.bf16.gmra.mxu0 %v1141
      %v2116 = vpop.f32.mrf.mxu0
      %v2117 = vadd.f32 0.0, %v2116
      %v2118 = vpop.f32.mrf.mxu0
      %v2119 = vpop.f32.mrf.mxu0
      %v2120 = vadd.f32 0.0, %v2119
      %v2121 = vpop.f32.mrf.mxu0
      %2122 = vmatprep.mubr.bf16.mxu0 0
      %2123 = vmatmul.mubr.bf16.gmra.mxu0 %v1144
      %v2124 = vpop.f32.mrf.mxu0
      %v2125 = vadd.f32 0.0, %v2124
      %v2126 = vpop.f32.mrf.mxu0
      %v2127 = vpop.f32.mrf.mxu0
      %v2128 = vadd.f32 0.0, %v2127
      %v2129 = vpop.f32.mrf.mxu0
      %2130 = vmatprep.mubr.bf16.mxu0 0
      %2131 = vmatmul.mubr.bf16.gmra.mxu0 %v1147
      %v2132 = vpop.f32.mrf.mxu0
      %v2133 = vadd.f32 0.0, %v2132
      %v2134 = vpop.f32.mrf.mxu0
      %v2135 = vpop.f32.mrf.mxu0
      %v2136 = vadd.f32 0.0, %v2135
      %v2137 = vpop.f32.mrf.mxu0
      %2138 = vmatprep.mubr.bf16.mxu0 0
      %2139 = vmatmul.mubr.bf16.gmra.mxu0 %v1150
      %v2140 = vpop.f32.mrf.mxu0
      %v2141 = vadd.f32 0.0, %v2140
      %v2142 = vpop.f32.mrf.mxu0
      %v2143 = vpop.f32.mrf.mxu0
      %v2144 = vadd.f32 0.0, %v2143
      %v2145 = vpop.f32.mrf.mxu0
      %2146 = vmatprep.mubr.bf16.mxu0 0
      %2147 = vmatmul.mubr.bf16.gmra.mxu0 %v1153
      %v2148 = vpop.f32.mrf.mxu0
      %v2149 = vadd.f32 0.0, %v2148
      %v2150 = vpop.f32.mrf.mxu0
      %v2151 = vpop.f32.mrf.mxu0
      %v2152 = vadd.f32 0.0, %v2151
      %v2153 = vpop.f32.mrf.mxu0
      %2154 = vmatprep.mubr.bf16.mxu0 0
      %2155 = vmatmul.mubr.bf16.gmra.mxu0 %v1690
      %v2156 = vpop.f32.mrf.mxu0
      %v2157 = vadd.f32 0.0, %v2156
      %v2158 = vpop.f32.mrf.mxu0
      %v2159 = vpop.f32.mrf.mxu0
      %v2160 = vadd.f32 0.0, %v2159
      %v2161 = vpop.f32.mrf.mxu0
      %2162 = vmatprep.mubr.bf16.mxu0 0
      %2163 = vmatmul.mubr.bf16.gmra.mxu0 %v2069
      %v2164 = vpop.f32.mrf.mxu0
      %v2165 = vadd.f32 0.0, %v2164
      %v2166 = vpop.f32.mrf.mxu0
      %v2167 = vpop.f32.mrf.mxu0
      %v2168 = vadd.f32 0.0, %v2167
      %v2169 = vpop.f32.mrf.mxu0
      %2170 = vdwg.mxu0
      %v2171 = vadd.f32 %v2039, %v2109
      %v2172 = vadd.f32 %v2040, %v2112
      %v2173 = vadd.f32 %v2041, %v2117
      %v2174 = vadd.f32 %v2042, %v2120
      %v2175 = vadd.f32 %v2043, %v2125
      %v2176 = vadd.f32 %v2044, %v2128
      %v2177 = vadd.f32 %v2045, %v2133
      %v2178 = vadd.f32 %v2046, %v2136
      %v2179 = vadd.f32 %v2047, %v2141
      %v2180 = vadd.f32 %v2048, %v2144
      %v2181 = vadd.f32 %v2049, %v2149
      %v2182 = vadd.f32 %v2050, %v2152
      %v2183 = vadd.f32 %v2051, %v2157
      %v2184 = vadd.f32 %v2052, %v2160
      %v2185 = vadd.f32 %v2053, %v2165
      %v2186 = vadd.f32 %v2054, %v2168
      %v2189 = vrot.slane %v1019, 1
      %v2190 = vrot.slane %v1029, 1
      %v2191 = vsel %vm1388, %v2189, %v2190
      %s2192 = scalar_lea.vmem %s4, 16
      %v2193 = vld [vmem:[%s2192] sm:$0x3]
      %v2195 = vsel %vm1130, %v2191, 0
      %v2198 = vsel %vm1155, %v2193, 0
      %2200 = vmatprep.subr.bf16.mxu0 0
      %2201 = vmatpush1.bf16.msra.mxu0 0
      %2202 = vmatprep.subr.bf16.mxu0 0
      %2203 = vmatpush1.bf16.msra.mxu0 0
      %2204 = vmatprep.subr.bf16.mxu0 0
      %2205 = vmatpush1.bf16.msra.mxu0 0
      %2206 = vmatprep.subr.bf16.mxu0 0
      %2207 = vmatpush1.bf16.msra.mxu0 0
      %2208 = vmatprep.subr.bf16.mxu0 0
      %2209 = vmatpush1.bf16.msra.mxu0 0
      %2210 = vmatprep.subr.bf16.mxu0 0
      %2211 = vmatpush1.bf16.msra.mxu0 0
      %2212 = vmatprep.subr.bf16.mxu0 0
      %2213 = vmatpush1.bf16.msra.mxu0 0
      %2214 = vmatprep.subr.bf16.mxu0 0
      %2215 = vmatpush1.bf16.msra.mxu0 %v2198
      %2216 = vmatprep.subr.bf16.mxu0 0
      %2217 = vmatpush2.bf16.msra.mxu0 0
      %2218 = vmatprep.subr.bf16.mxu0 0
      %2219 = vmatpush2.bf16.msra.mxu0 0
      %2220 = vmatprep.subr.bf16.mxu0 0
      %2221 = vmatpush2.bf16.msra.mxu0 0
      %2222 = vmatprep.subr.bf16.mxu0 0
      %2223 = vmatpush2.bf16.msra.mxu0 0
      %2224 = vmatprep.subr.bf16.mxu0 0
      %2225 = vmatpush2.bf16.msra.mxu0 0
      %2226 = vmatprep.subr.bf16.mxu0 0
      %2227 = vmatpush2.bf16.msra.mxu0 0
      %2228 = vmatprep.subr.bf16.mxu0 0
      %2229 = vmatpush2.bf16.msra.mxu0 0
      %2230 = vmatprep.subr.bf16.mxu0 0
      %2231 = vmatpush2.bf16.msra.mxu0 0
      %2232 = vmatprep.mubr.bf16.mxu0 0
      %2233 = vmatmul.mubr.bf16.gmra.mxu0 %v1422
      %v2234 = vpop.f32.mrf.mxu0
      %v2235 = vadd.f32 0.0, %v2234
      %v2236 = vpop.f32.mrf.mxu0
      %v2237 = vpop.f32.mrf.mxu0
      %v2238 = vadd.f32 0.0, %v2237
      %v2239 = vpop.f32.mrf.mxu0
      %2240 = vmatprep.mubr.bf16.mxu0 0
      %2241 = vmatmul.mubr.bf16.gmra.mxu0 %v1425
      %v2242 = vpop.f32.mrf.mxu0
      %v2243 = vadd.f32 0.0, %v2242
      %v2244 = vpop.f32.mrf.mxu0
      %v2245 = vpop.f32.mrf.mxu0
      %v2246 = vadd.f32 0.0, %v2245
      %v2247 = vpop.f32.mrf.mxu0
      %2248 = vmatprep.mubr.bf16.mxu0 0
      %2249 = vmatmul.mubr.bf16.gmra.mxu0 %v1428
      %v2250 = vpop.f32.mrf.mxu0
      %v2251 = vadd.f32 0.0, %v2250
      %v2252 = vpop.f32.mrf.mxu0
      %v2253 = vpop.f32.mrf.mxu0
      %v2254 = vadd.f32 0.0, %v2253
      %v2255 = vpop.f32.mrf.mxu0
      %2256 = vmatprep.mubr.bf16.mxu0 0
      %2257 = vmatmul.mubr.bf16.gmra.mxu0 %v1431
      %v2258 = vpop.f32.mrf.mxu0
      %v2259 = vadd.f32 0.0, %v2258
      %v2260 = vpop.f32.mrf.mxu0
      %v2261 = vpop.f32.mrf.mxu0
      %v2262 = vadd.f32 0.0, %v2261
      %v2263 = vpop.f32.mrf.mxu0
      %2264 = vmatprep.mubr.bf16.mxu0 0
      %2265 = vmatmul.mubr.bf16.gmra.mxu0 %v1434
      %v2266 = vpop.f32.mrf.mxu0
      %v2267 = vadd.f32 0.0, %v2266
      %v2268 = vpop.f32.mrf.mxu0
      %v2269 = vpop.f32.mrf.mxu0
      %v2270 = vadd.f32 0.0, %v2269
      %v2271 = vpop.f32.mrf.mxu0
      %2272 = vmatprep.mubr.bf16.mxu0 0
      %2273 = vmatmul.mubr.bf16.gmra.mxu0 %v1437
      %v2274 = vpop.f32.mrf.mxu0
      %v2275 = vadd.f32 0.0, %v2274
      %v2276 = vpop.f32.mrf.mxu0
      %v2277 = vpop.f32.mrf.mxu0
      %v2278 = vadd.f32 0.0, %v2277
      %v2279 = vpop.f32.mrf.mxu0
      %2280 = vmatprep.mubr.bf16.mxu0 0
      %2281 = vmatmul.mubr.bf16.gmra.mxu0 %v1816
      %v2282 = vpop.f32.mrf.mxu0
      %v2283 = vadd.f32 0.0, %v2282
      %v2284 = vpop.f32.mrf.mxu0
      %v2285 = vpop.f32.mrf.mxu0
      %v2286 = vadd.f32 0.0, %v2285
      %v2287 = vpop.f32.mrf.mxu0
      %2288 = vmatprep.mubr.bf16.mxu0 0
      %2289 = vmatmul.mubr.bf16.gmra.mxu0 %v2195
      %v2290 = vpop.f32.mrf.mxu0
      %v2291 = vadd.f32 0.0, %v2290
      %v2292 = vpop.f32.mrf.mxu0
      %v2293 = vpop.f32.mrf.mxu0
      %v2294 = vadd.f32 0.0, %v2293
      %v2295 = vpop.f32.mrf.mxu0
      %2296 = vdwg.mxu0
      %v2297 = vadd.f32 %v2171, %v2235
      %v2298 = vadd.f32 %v2172, %v2238
      %v2299 = vadd.f32 %v2173, %v2243
      %v2300 = vadd.f32 %v2174, %v2246
      %v2301 = vadd.f32 %v2175, %v2251
      %v2302 = vadd.f32 %v2176, %v2254
      %v2303 = vadd.f32 %v2177, %v2259
      %v2304 = vadd.f32 %v2178, %v2262
      %v2305 = vadd.f32 %v2179, %v2267
      %v2306 = vadd.f32 %v2180, %v2270
      %v2307 = vadd.f32 %v2181, %v2275
      %v2308 = vadd.f32 %v2182, %v2278
      %v2309 = vadd.f32 %v2183, %v2283
      %v2310 = vadd.f32 %v2184, %v2286
      %v2311 = vadd.f32 %v2185, %v2291
      %v2312 = vadd.f32 %v2186, %v2294
      %v2313 = vld [vmem:[%s8] sm:$0x1]
      %v2315 = vlaneseq
      %v2316 = vshrl.u32 %v2315, 7
      %v2317 = vsub.s32 0, %v2316
      %v2318 = vrot.slane %v2313, %v2317
      %v2320 = vmul.f32 %v2297, %v2318
      %v2321 = vmul.f32 %v2298, %v2318
      %v2322 = vmul.f32 %v2299, %v2318
      %v2323 = vmul.f32 %v2300, %v2318
      %v2324 = vmul.f32 %v2301, %v2318
      %v2325 = vmul.f32 %v2302, %v2318
      %v2326 = vmul.f32 %v2303, %v2318
      %v2327 = vmul.f32 %v2304, %v2318
      %v2328 = vmul.f32 %v2305, %v2318
      %v2329 = vmul.f32 %v2306, %v2318
      %v2330 = vmul.f32 %v2307, %v2318
      %v2331 = vmul.f32 %v2308, %v2318
      %v2332 = vmul.f32 %v2309, %v2318
      %v2333 = vmul.f32 %v2310, %v2318
      %v2334 = vmul.f32 %v2311, %v2318
      %v2335 = vmul.f32 %v2312, %v2318
      %v2336 = vld [vmem:[%s9] sm:$0x1]
      %v2338 = vlaneseq
      %v2339 = vshrl.u32 %v2338, 7
      %v2340 = vsub.s32 0, %v2339
      %v2341 = vrot.slane %v2336, %v2340
      %v2343 = vadd.f32 %v2320, %v2341
      %v2344 = vadd.f32 %v2321, %v2341
      %v2345 = vadd.f32 %v2322, %v2341
      %v2346 = vadd.f32 %v2323, %v2341
      %v2347 = vadd.f32 %v2324, %v2341
      %v2348 = vadd.f32 %v2325, %v2341
      %v2349 = vadd.f32 %v2326, %v2341
      %v2350 = vadd.f32 %v2327, %v2341
      %v2351 = vadd.f32 %v2328, %v2341
      %v2352 = vadd.f32 %v2329, %v2341
      %v2353 = vadd.f32 %v2330, %v2341
      %v2354 = vadd.f32 %v2331, %v2341
      %v2355 = vadd.f32 %v2332, %v2341
      %v2356 = vadd.f32 %v2333, %v2341
      %v2357 = vadd.f32 %v2334, %v2341
      %v2358 = vadd.f32 %v2335, %v2341
      %v2359 = vmax.f32 %v2343, 0.0
      %v2360 = vmax.f32 %v2344, 0.0
      %v2361 = vmax.f32 %v2345, 0.0
      %v2362 = vmax.f32 %v2346, 0.0
      %v2363 = vmax.f32 %v2347, 0.0
      %v2364 = vmax.f32 %v2348, 0.0
      %v2365 = vmax.f32 %v2349, 0.0
      %v2366 = vmax.f32 %v2350, 0.0
      %v2367 = vmax.f32 %v2351, 0.0
      %v2368 = vmax.f32 %v2352, 0.0
      %v2369 = vmax.f32 %v2353, 0.0
      %v2370 = vmax.f32 %v2354, 0.0
      %v2371 = vmax.f32 %v2355, 0.0
      %v2372 = vmax.f32 %v2356, 0.0
      %v2373 = vmax.f32 %v2357, 0.0
      %v2374 = vmax.f32 %v2358, 0.0
      %v2375 = vpack.c.bf16 %v2360, %v2359
      %v2376 = vpack.c.bf16 %v2362, %v2361
      %v2377 = vpack.c.bf16 %v2364, %v2363
      %v2378 = vpack.c.bf16 %v2366, %v2365
      %v2379 = vpack.c.bf16 %v2368, %v2367
      %v2380 = vpack.c.bf16 %v2370, %v2369
      %v2381 = vpack.c.bf16 %v2372, %v2371
      %v2382 = vpack.c.bf16 %v2374, %v2373
      %v2383 = vld [vmem:[%s5] sm:$0x3]
      %v2385 = vsel %vm1130, %v2375, 0
      %v2388 = vsel %vm1130, %v2376, 0
      %v2391 = vsel %vm1130, %v2377, 0
      %v2394 = vsel %vm1130, %v2378, 0
      %v2397 = vsel %vm1130, %v2379, 0
      %v2400 = vsel %vm1130, %v2380, 0
      %v2403 = vsel %vm1130, %v2381, 0
      %v2406 = vsel %vm1130, %v2382, 0
      %v2409 = vsel %vm1155, %v2383, 0
      %2411 = vmatprep.subr.bf16.mxu0 0
      %2412 = vmatpush1.bf16.msra.mxu0 0
      %2413 = vmatprep.subr.bf16.mxu0 0
      %2414 = vmatpush1.bf16.msra.mxu0 0
      %2415 = vmatprep.subr.bf16.mxu0 0
      %2416 = vmatpush1.bf16.msra.mxu0 0
      %2417 = vmatprep.subr.bf16.mxu0 0
      %2418 = vmatpush1.bf16.msra.mxu0 0
      %2419 = vmatprep.subr.bf16.mxu0 0
      %2420 = vmatpush1.bf16.msra.mxu0 0
      %2421 = vmatprep.subr.bf16.mxu0 0
      %2422 = vmatpush1.bf16.msra.mxu0 0
      %2423 = vmatprep.subr.bf16.mxu0 0
      %2424 = vmatpush1.bf16.msra.mxu0 0
      %2425 = vmatprep.subr.bf16.mxu0 0
      %2426 = vmatpush1.bf16.msra.mxu0 %v2409
      %2427 = vmatprep.subr.bf16.mxu0 0
      %2428 = vmatpush2.bf16.msra.mxu0 0
      %2429 = vmatprep.subr.bf16.mxu0 0
      %2430 = vmatpush2.bf16.msra.mxu0 0
      %2431 = vmatprep.subr.bf16.mxu0 0
      %2432 = vmatpush2.bf16.msra.mxu0 0
      %2433 = vmatprep.subr.bf16.mxu0 0
      %2434 = vmatpush2.bf16.msra.mxu0 0
      %2435 = vmatprep.subr.bf16.mxu0 0
      %2436 = vmatpush2.bf16.msra.mxu0 0
      %2437 = vmatprep.subr.bf16.mxu0 0
      %2438 = vmatpush2.bf16.msra.mxu0 0
      %2439 = vmatprep.subr.bf16.mxu0 0
      %2440 = vmatpush2.bf16.msra.mxu0 0
      %2441 = vmatprep.subr.bf16.mxu0 0
      %2442 = vmatpush2.bf16.msra.mxu0 0
      %2443 = vmatprep.mubr.bf16.mxu0 0
      %2444 = vmatmul.mubr.bf16.gmra.mxu0 %v2385
      %v2445 = vpop.f32.mrf.mxu0
      %v2446 = vadd.f32 0.0, %v2445
      %v2447 = vpop.f32.mrf.mxu0
      %v2448 = vpop.f32.mrf.mxu0
      %v2449 = vadd.f32 0.0, %v2448
      %v2450 = vpop.f32.mrf.mxu0
      %2451 = vmatprep.mubr.bf16.mxu0 0
      %2452 = vmatmul.mubr.bf16.gmra.mxu0 %v2388
      %v2453 = vpop.f32.mrf.mxu0
      %v2454 = vadd.f32 0.0, %v2453
      %v2455 = vpop.f32.mrf.mxu0
      %v2456 = vpop.f32.mrf.mxu0
      %v2457 = vadd.f32 0.0, %v2456
      %v2458 = vpop.f32.mrf.mxu0
      %2459 = vmatprep.mubr.bf16.mxu0 0
      %2460 = vmatmul.mubr.bf16.gmra.mxu0 %v2391
      %v2461 = vpop.f32.mrf.mxu0
      %v2462 = vadd.f32 0.0, %v2461
      %v2463 = vpop.f32.mrf.mxu0
      %v2464 = vpop.f32.mrf.mxu0
      %v2465 = vadd.f32 0.0, %v2464
      %v2466 = vpop.f32.mrf.mxu0
      %2467 = vmatprep.mubr.bf16.mxu0 0
      %2468 = vmatmul.mubr.bf16.gmra.mxu0 %v2394
      %v2469 = vpop.f32.mrf.mxu0
      %v2470 = vadd.f32 0.0, %v2469
      %v2471 = vpop.f32.mrf.mxu0
      %v2472 = vpop.f32.mrf.mxu0
      %v2473 = vadd.f32 0.0, %v2472
      %v2474 = vpop.f32.mrf.mxu0
      %2475 = vmatprep.mubr.bf16.mxu0 0
      %2476 = vmatmul.mubr.bf16.gmra.mxu0 %v2397
      %v2477 = vpop.f32.mrf.mxu0
      %v2478 = vadd.f32 0.0, %v2477
      %v2479 = vpop.f32.mrf.mxu0
      %v2480 = vpop.f32.mrf.mxu0
      %v2481 = vadd.f32 0.0, %v2480
      %v2482 = vpop.f32.mrf.mxu0
      %2483 = vmatprep.mubr.bf16.mxu0 0
      %2484 = vmatmul.mubr.bf16.gmra.mxu0 %v2400
      %v2485 = vpop.f32.mrf.mxu0
      %v2486 = vadd.f32 0.0, %v2485
      %v2487 = vpop.f32.mrf.mxu0
      %v2488 = vpop.f32.mrf.mxu0
      %v2489 = vadd.f32 0.0, %v2488
      %v2490 = vpop.f32.mrf.mxu0
      %2491 = vmatprep.mubr.bf16.mxu0 0
      %2492 = vmatmul.mubr.bf16.gmra.mxu0 %v2403
      %v2493 = vpop.f32.mrf.mxu0
      %v2494 = vadd.f32 0.0, %v2493
      %v2495 = vpop.f32.mrf.mxu0
      %v2496 = vpop.f32.mrf.mxu0
      %v2497 = vadd.f32 0.0, %v2496
      %v2498 = vpop.f32.mrf.mxu0
      %2499 = vmatprep.mubr.bf16.mxu0 0
      %2500 = vmatmul.mubr.bf16.gmra.mxu0 %v2406
      %v2501 = vpop.f32.mrf.mxu0
      %v2502 = vadd.f32 0.0, %v2501
      %v2503 = vpop.f32.mrf.mxu0
      %v2504 = vpop.f32.mrf.mxu0
      %v2505 = vadd.f32 0.0, %v2504
      %v2506 = vpop.f32.mrf.mxu0
      %2507 = vdwg.mxu0
      %v2508 = vunpack.c.l.bf16 %v583
      %v2509 = vunpack.c.l.bf16 %v584
      %v2510 = vunpack.c.l.bf16 %v585
      %v2511 = vunpack.c.l.bf16 %v586
      %v2512 = vunpack.c.l.bf16 %v587
      %v2513 = vunpack.c.l.bf16 %v588
      %v2514 = vunpack.c.l.bf16 %v589
      %v2515 = vunpack.c.l.bf16 %v590
      %v2516 = vunpack.c.l.bf16 %v591
      %v2517 = vunpack.c.l.bf16 %v592
      %v2518 = vunpack.c.l.bf16 %v593
      %v2519 = vunpack.c.l.bf16 %v594
      %v2520 = vunpack.c.l.bf16 %v595
      %v2521 = vunpack.c.l.bf16 %v596
      %v2522 = vunpack.c.l.bf16 %v597
      %v2523 = vunpack.c.l.bf16 %v598
      %v2524 = vld [vmem:[%s10] sm:$0x1]
      %v2526 = vlaneseq
      %v2527 = vshrl.u32 %v2526, 7
      %v2528 = vsub.s32 0, %v2527
      %v2529 = vrot.slane %v2524, %v2528
      %v2531 = vmul.f32 %v2446, %v2529
      %v2532 = vmul.f32 %v2449, %v2529
      %v2533 = vmul.f32 %v2454, %v2529
      %v2534 = vmul.f32 %v2457, %v2529
      %v2535 = vmul.f32 %v2462, %v2529
      %v2536 = vmul.f32 %v2465, %v2529
      %v2537 = vmul.f32 %v2470, %v2529
      %v2538 = vmul.f32 %v2473, %v2529
      %v2539 = vmul.f32 %v2478, %v2529
      %v2540 = vmul.f32 %v2481, %v2529
      %v2541 = vmul.f32 %v2486, %v2529
      %v2542 = vmul.f32 %v2489, %v2529
      %v2543 = vmul.f32 %v2494, %v2529
      %v2544 = vmul.f32 %v2497, %v2529
      %v2545 = vmul.f32 %v2502, %v2529
      %v2546 = vmul.f32 %v2505, %v2529
      %v2547 = vld [vmem:[%s11] sm:$0x1]
      %v2549 = vlaneseq
      %v2550 = vshrl.u32 %v2549, 7
      %v2551 = vsub.s32 0, %v2550
      %v2552 = vrot.slane %v2547, %v2551
      %v2554 = vadd.f32 %v2531, %v2552
      %v2555 = vadd.f32 %v2532, %v2552
      %v2556 = vadd.f32 %v2533, %v2552
      %v2557 = vadd.f32 %v2534, %v2552
      %v2558 = vadd.f32 %v2535, %v2552
      %v2559 = vadd.f32 %v2536, %v2552
      %v2560 = vadd.f32 %v2537, %v2552
      %v2561 = vadd.f32 %v2538, %v2552
      %v2562 = vadd.f32 %v2539, %v2552
      %v2563 = vadd.f32 %v2540, %v2552
      %v2564 = vadd.f32 %v2541, %v2552
      %v2565 = vadd.f32 %v2542, %v2552
      %v2566 = vadd.f32 %v2543, %v2552
      %v2567 = vadd.f32 %v2544, %v2552
      %v2568 = vadd.f32 %v2545, %v2552
      %v2569 = vadd.f32 %v2546, %v2552
      %v2570 = vadd.f32 %v2554, %v2508
      %v2571 = vadd.f32 %v2555, %v2509
      %v2572 = vadd.f32 %v2556, %v2510
      %v2573 = vadd.f32 %v2557, %v2511
      %v2574 = vadd.f32 %v2558, %v2512
      %v2575 = vadd.f32 %v2559, %v2513
      %v2576 = vadd.f32 %v2560, %v2514
      %v2577 = vadd.f32 %v2561, %v2515
      %v2578 = vadd.f32 %v2562, %v2516
      %v2579 = vadd.f32 %v2563, %v2517
      %v2580 = vadd.f32 %v2564, %v2518
      %v2581 = vadd.f32 %v2565, %v2519
      %v2582 = vadd.f32 %v2566, %v2520
      %v2583 = vadd.f32 %v2567, %v2521
      %v2584 = vadd.f32 %v2568, %v2522
      %v2585 = vadd.f32 %v2569, %v2523
      %v2586 = vmax.f32 %v2570, 0.0
      %v2587 = vmax.f32 %v2571, 0.0
      %v2588 = vmax.f32 %v2572, 0.0
      %v2589 = vmax.f32 %v2573, 0.0
      %v2590 = vmax.f32 %v2574, 0.0
      %v2591 = vmax.f32 %v2575, 0.0
      %v2592 = vmax.f32 %v2576, 0.0
      %v2593 = vmax.f32 %v2577, 0.0
      %v2594 = vmax.f32 %v2578, 0.0
      %v2595 = vmax.f32 %v2579, 0.0
      %v2596 = vmax.f32 %v2580, 0.0
      %v2597 = vmax.f32 %v2581, 0.0
      %v2598 = vmax.f32 %v2582, 0.0
      %v2599 = vmax.f32 %v2583, 0.0
      %v2600 = vmax.f32 %v2584, 0.0
      %v2601 = vmax.f32 %v2585, 0.0
      %2602 = vst.msk [vmem:[%s580] sm:$0xff] %vm661, %v2586
      %2603 = vst.msk [vmem:[%s580 + $0x8] sm:$0xff] %vm661, %v2587
      %2604 = vst.msk [vmem:[%s580 + $0x10] sm:$0xff] %vm661, %v2588
      %2605 = vst.msk [vmem:[%s580 + $0x18] sm:$0xff] %vm661, %v2589
      %2606 = vst.msk [vmem:[%s580 + $0x20] sm:$0xff] %vm661, %v2590
      %2607 = vst.msk [vmem:[%s580 + $0x28] sm:$0xff] %vm661, %v2591
      %2608 = vst.msk [vmem:[%s580 + $0x30] sm:$0xff] %vm661, %v2592
      %2609 = vst.msk [vmem:[%s580 + $0x38] sm:$0xff] %vm661, %v2593
      %2610 = vst.msk [vmem:[%s580 + $0x40] sm:$0xff] %vm661, %v2594
      %2611 = vst.msk [vmem:[%s580 + $0x48] sm:$0xff] %vm661, %v2595
      %2612 = vst.msk [vmem:[%s580 + $0x50] sm:$0xff] %vm661, %v2596
      %2613 = vst.msk [vmem:[%s580 + $0x58] sm:$0xff] %vm661, %v2597
      %2614 = vst.msk [vmem:[%s580 + $0x60] sm:$0xff] %vm661, %v2598
      %2615 = vst.msk [vmem:[%s580 + $0x68] sm:$0xff] %vm661, %v2599
      %2616 = vst.msk [vmem:[%s580 + $0x70] sm:$0xff] %vm661, %v2600
      %2617 = vst.msk [vmem:[%s580 + $0x78] sm:$0xff] %vm661, %v2601
      %s2618 = smul.u32 8, %s28
      %p2619 = scmp.lt.s32.totalorder %s27, 1
      %s2620 = scalar_select %p2619, %s27, 1
      %p2621 = scmp.lt.s32.totalorder %s2618, 15
      %s2622 = scalar_select %p2621, %s2618, 15
      %s2623 = smul.addr %s2622, 2
      %s2624 = smul.addr %s2620, 32
      %s2625 = sadd.s32 %s2623, %s2624
      %s2626 = smul.addr %s2625, 8
      %s2627 = scalar_lea.vmem %s12, %s2626
      // Predicated region
      $region69: #{bottleneck_forward.1} parent=67 // pred_check
        %p2628 = pneg %p344
      $region70: #{bottleneck_forward.1} parent=67 // pred_check_branch
        %2630 = sbr.rel (%p2628) target = $region72
      $region71: #{bottleneck_forward.1} parent=67 // pred_region
        %s2631 = smul.u32 8, %s28
      $region72: #{bottleneck_forward.1} parent=67 // pred_fallthru
        _
    $region68: #{bottleneck_forward.1} parent=5 // pred_fallthru
      _
    %p2632 = scmp.le.s32.totalorder 2, %s18
    // Predicated region
    $region73: #{bottleneck_forward.1} parent=5 // pred_check
      %p2633 = pneg %p2632
    $region74: #{bottleneck_forward.1} parent=5 // pred_check_branch
      %2635 = sbr.rel (%p2633) target = $region76
    $region75: #{bottleneck_forward.1} parent=5 // pred_region
      %s2636 = ssub.s32 %s18, 2
      // Predicated region
      $region77: #{bottleneck_forward.1} parent=75 // pred_check
        %p2637 = pneg %p350
      $region78: #{bottleneck_forward.1} parent=75 // pred_check_branch
        %2639 = sbr.rel (%p2637) target = $region80
      $region79: #{bottleneck_forward.1} parent=75 // pred_region
        %s2640 = smul.u32 8, %s30
        %p2641 = scmp.lt.s32.totalorder %s29, 1
        %s2642 = scalar_select %p2641, %s29, 1
        %p2643 = scmp.lt.s32.totalorder %s2640, 15
        %s2644 = scalar_select %p2643, %s2640, 15
        %s2645 = smul.addr %s2644, 2
        %s2646 = smul.addr %s2642, 32
        %s2647 = sadd.s32 %s2645, %s2646
        %s2648 = smul.addr %s2647, 8
        %s2649 = scalar_lea.vmem %s12, %s2648
      $region80: #{bottleneck_forward.1} parent=75 // pred_fallthru
        _
    $region76: #{bottleneck_forward.1} parent=5 // pred_fallthru
      _
  $region6: #{bottleneck_forward.1} parent=0 // loop_footer
    %s22 = sadd.s32 1, %s18
  $region7: #{bottleneck_forward.1} parent=0 // loop_footer_branch
    %17 = sbr.rel target = $region3
  $region8: #{bottleneck_forward.1} parent=0 // loop_exit
    _

</llo_original>
